<compile_context>
chip_gen: v5e
topology: v5e:2x2
jax: 0.10.0
libtpu: 0.0.40
codegen_flags: <defaults>
</compile_context>

<pallas_src>
import functools

import jax
import jax.numpy as jnp
from jax import lax
from jax.experimental import pallas as pl
from jax.experimental.pallas import tpu as pltpu


# ----------------------------------------------------------------------------
# Fused Inception Pallas kernel (one grid step = one batch element)
# ----------------------------------------------------------------------------
def _inception_kernel(*refs, H, W, n1x1, n3x3red, n3x3, n5x5red, n5x5,
                      pool_planes):
    HW = H * W
    halo = W + 1                      # enough halo for offsets in [-(W+1), W+1]
    f32 = jnp.float32
    bf16 = jnp.bfloat16

    it = iter(refs)
    x_ref = next(it)
    has_in_matmul = (n1x1 > 0) or (n3x3 > 0) or (n5x5 > 0)
    if has_in_matmul:
        w_in_ref, b_in_ref = next(it), next(it)
    if n3x3 > 0:
        w2b_ref, b2b_ref = next(it), next(it)
    if n5x5 > 0:
        w3b_ref, b3b_ref, w3c_ref, b3c_ref = next(it), next(it), next(it), next(it)
    if pool_planes > 0:
        w4_ref, b4_ref = next(it), next(it)
    o_ref = next(it)

    x = x_ref[...]                                          # (Cin, HW) f32

    # Width-direction validity masks for a 3x3 stencil (height direction is
    # handled by the zero / -inf halo of the flattened spatial axis).
    w_pos = lax.broadcasted_iota(jnp.int32, (1, HW), 1) % W
    m_left = w_pos >= 1               # (h, w-1) is a real pixel
    m_right = w_pos <= W - 2          # (h, w+1) is a real pixel

    def shifted_taps(t, fill):
        """9 lane-shifted copies of t (C, HW): taps of a 3x3 stencil, pad=1."""
        c = t.shape[0]
        pad = jnp.full((c, halo), fill, t.dtype)
        padded = jnp.concatenate([pad, t, pad], axis=1)     # (C, HW + 2*halo)
        taps = []
        for dh in (-1, 0, 1):
            for dw in (-1, 0, 1):
                off = dh * W + dw
                sl = padded[:, halo + off: halo + off + HW]
                if dw == -1:
                    sl = jnp.where(m_left, sl, fill)
                elif dw == 1:
                    sl = jnp.where(m_right, sl, fill)
                taps.append(sl)
        return taps

    def conv3x3_relu(t, w_ref_, b_ref_):
        # Single im2col matmul: (Cout, 9*Cin) @ (9*Cin, HW), bf16 in / f32 acc.
        patches = jnp.concatenate(shifted_taps(t, 0.0), axis=0)
        y = jnp.dot(w_ref_[...], patches.astype(bf16),
                    preferred_element_type=f32)
        return jnp.maximum(y + b_ref_[...], 0.0)

    # ---- fused input-side 1x1 convs: rows = [branch1x1 ; 3x3red ; 5x5red] ----
    if has_in_matmul:
        t_in = jnp.dot(w_in_ref[...], x.astype(bf16),
                       preferred_element_type=f32)
        t_in = jnp.maximum(t_in + b_in_ref[...], 0.0)       # (Csum, HW)

    outs = []
    off = 0
    if n1x1 > 0:
        outs.append(t_in[off:off + n1x1])                   # branch1x1 output
        off += n1x1
    if n3x3 > 0:
        t2a = t_in[off:off + n3x3red]
        off += n3x3red
        outs.append(conv3x3_relu(t2a, w2b_ref, b2b_ref))    # branch3x3 output
    if n5x5 > 0:
        t3a = t_in[off:off + n5x5red]
        off += n5x5red
        t3b = conv3x3_relu(t3a, w3b_ref, b3b_ref)
        outs.append(conv3x3_relu(t3b, w3c_ref, b3c_ref))    # branch5x5 output
    if pool_planes > 0:
        # 3x3 max pool, stride 1, pad 1 (padding never wins the max).
        taps = shifted_taps(x, -jnp.inf)
        pooled = functools.reduce(jnp.maximum, taps)        # (Cin, HW) f32
        y4 = jnp.dot(w4_ref[...], pooled.astype(bf16),
                     preferred_element_type=f32)
        outs.append(jnp.maximum(y4 + b4_ref[...], 0.0))     # branch_pool output

    # Channel-concatenated output: (Ctot, HW) -- lane-dense single store.
    o_ref[...] = jnp.concatenate(outs, axis=0)


# ----------------------------------------------------------------------------
# Wrapper: builds specs / operands and calls the fused kernel (NCHW in / out)
# ----------------------------------------------------------------------------
def inception_forward(x_nchw, kparams, cfg):
    n1x1, n3x3red, n3x3 = cfg["n1x1"], cfg["n3x3red"], cfg["n3x3"]
    n5x5red, n5x5, pool_planes = cfg["n5x5red"], cfg["n5x5"], cfg["pool_planes"]
    N, Cin, H, W = x_nchw.shape
    HW = H * W
    Ctot = n1x1 + n3x3 + n5x5 + pool_planes
    assert Ctot > 0, "Inception block must have at least one branch"

    # (N, Cin, H, W) -> (N, Cin, H*W): contiguous reshape, no transpose needed.
    x2 = x_nchw.reshape(N, Cin, HW).astype(jnp.float32)

    operands = [x2]
    in_specs = [pl.BlockSpec((None, Cin, HW), lambda n: (n, 0, 0))]

    def add_param(name):
        arr = kparams[name]
        operands.append(arr)
        in_specs.append(pl.BlockSpec(arr.shape, lambda n: (0, 0)))

    if (n1x1 > 0) or (n3x3 > 0) or (n5x5 > 0):
        add_param("w_in"), add_param("b_in")
    if n3x3 > 0:
        add_param("w2b"), add_param("b2b")
    if n5x5 > 0:
        add_param("w3b"), add_param("b3b"), add_param("w3c"), add_param("b3c")
    if pool_planes > 0:
        add_param("w4"), add_param("b4")

    kernel = functools.partial(
        _inception_kernel, H=H, W=W, n1x1=n1x1, n3x3red=n3x3red, n3x3=n3x3,
        n5x5red=n5x5red, n5x5=n5x5, pool_planes=pool_planes)

    out = pl.pallas_call(
        kernel,
        out_shape=jax.ShapeDtypeStruct((N, Ctot, HW), jnp.float32),
        grid=(N,),
        in_specs=in_specs,
        out_specs=pl.BlockSpec((None, Ctot, HW), lambda n: (n, 0, 0)),
        compiler_params=pltpu.CompilerParams(
            dimension_semantics=("parallel",),
            vmem_limit_bytes=32 * 1024 * 1024),
    )(*operands)
    return out.reshape(N, Ctot, H, W)                       # already NCHW


# ----------------------------------------------------------------------------
# Parameter construction (deterministic, synthetic) + exact BN folding/packing
# ----------------------------------------------------------------------------
_EPS = 1e-5


def _make_conv_bn(key, cin, cout, k):
    kw_, kb_, kg_, kbeta_, km_, kv_ = jax.random.split(key, 6)
    w = jax.random.normal(kw_, (cout, cin, k, k), jnp.float32) * 0.1   # OIHW
    b = jax.random.normal(kb_, (cout,), jnp.float32) * 0.1
    gamma = 1.0 + 0.1 * jax.random.normal(kg_, (cout,), jnp.float32)
    beta = 0.1 * jax.random.normal(kbeta_, (cout,), jnp.float32)
    mean = 0.1 * jax.random.normal(km_, (cout,), jnp.float32)
    var = 0.5 + jnp.abs(jax.random.normal(kv_, (cout,), jnp.float32))
    return dict(w=w, b=b, gamma=gamma, beta=beta, mean=mean, var=var)


def _fold_bn(p):
    # Fold eval-mode BatchNorm into the conv weight/bias (exact).
    scale = p["gamma"] / jnp.sqrt(p["var"] + _EPS)
    w_f = p["w"] * scale[:, None, None, None]
    b_f = (p["b"] - p["mean"]) * scale + p["beta"]
    return w_f, b_f


def _pack_1x1(w_f):     # OIHW (O,I,1,1) -> (O, I)
    return w_f[:, :, 0, 0]


def _pack_3x3(w_f):     # OIHW (O,I,3,3) -> (O, 9*I), tap-major then channel
    O, I = w_f.shape[0], w_f.shape[1]
    return jnp.transpose(w_f, (0, 2, 3, 1)).reshape(O, 9 * I)


def make_inception_params(key, in_planes, n1x1, n3x3red, n3x3, n5x5red, n5x5,
                          pool_planes):
    keys = jax.random.split(key, 7)
    raw = dict(
        b1=_make_conv_bn(keys[0], in_planes, n1x1, 1),
        b2a=_make_conv_bn(keys[1], in_planes, n3x3red, 1),
        b2b=_make_conv_bn(keys[2], n3x3red, n3x3, 3),
        b3a=_make_conv_bn(keys[3], in_planes, n5x5red, 1),
        b3b=_make_conv_bn(keys[4], n5x5red, n5x5, 3),
        b3c=_make_conv_bn(keys[5], n5x5, n5x5, 3),
        b4=_make_conv_bn(keys[6], in_planes, pool_planes, 1),
    )
    folded = {k: _fold_bn(v) for k, v in raw.items()}   # OIHW + bias (f32 ref)

    bf16 = jnp.bfloat16
    kp = {}
    w_rows, b_rows = [], []
    if n1x1 > 0:
        w_rows.append(_pack_1x1(folded["b1"][0])); b_rows.append(folded["b1"][1])
    if n3x3 > 0:
        w_rows.append(_pack_1x1(folded["b2a"][0])); b_rows.append(folded["b2a"][1])
    if n5x5 > 0:
        w_rows.append(_pack_1x1(folded["b3a"][0])); b_rows.append(folded["b3a"][1])
    if w_rows:
        kp["w_in"] = jnp.concatenate(w_rows, axis=0).astype(bf16)
        kp["b_in"] = jnp.concatenate(b_rows, axis=0)[:, None].astype(jnp.float32)
    if n3x3 > 0:
        kp["w2b"] = _pack_3x3(folded["b2b"][0]).astype(bf16)
        kp["b2b"] = folded["b2b"][1][:, None].astype(jnp.float32)
    if n5x5 > 0:
        kp["w3b"] = _pack_3x3(folded["b3b"][0]).astype(bf16)
        kp["b3b"] = folded["b3b"][1][:, None].astype(jnp.float32)
        kp["w3c"] = _pack_3x3(folded["b3c"][0]).astype(bf16)
        kp["b3c"] = folded["b3c"][1][:, None].astype(jnp.float32)
    if pool_planes > 0:
        kp["w4"] = _pack_1x1(folded["b4"][0]).astype(bf16)
        kp["b4"] = folded["b4"][1][:, None].astype(jnp.float32)
    return kp, folded


# ----------------------------------------------------------------------------
# Pure-JAX reference (NCHW, float32, same folded params) for correctness
# ----------------------------------------------------------------------------
def _ref_conv(x, w, b, pad):
    y = lax.conv_general_dilated(x, w, (1, 1), [(pad, pad), (pad, pad)],
                                 dimension_numbers=("NCHW", "OIHW", "NCHW"))
    return jnp.maximum(y + b[None, :, None, None], 0.0)


def _ref_maxpool(x):
    return lax.reduce_window(x, -jnp.inf, lax.max, (1, 1, 3, 3), (1, 1, 1, 1),
                             [(0, 0), (0, 0), (1, 1), (1, 1)])


def inception_reference(x, folded, cfg):
    outs = []
    if cfg["n1x1"] > 0:
        outs.append(_ref_conv(x, *folded["b1"], pad=0))
    if cfg["n3x3"] > 0:
        t = _ref_conv(x, *folded["b2a"], pad=0)
        outs.append(_ref_conv(t, *folded["b2b"], pad=1))
    if cfg["n5x5"] > 0:
        t = _ref_conv(x, *folded["b3a"], pad=0)
        t = _ref_conv(t, *folded["b3b"], pad=1)
        outs.append(_ref_conv(t, *folded["b3c"], pad=1))
    if cfg["pool_planes"] > 0:
        outs.append(_ref_conv(_ref_maxpool(x), *folded["b4"], pad=0))
    return jnp.concatenate(outs, axis=1)


# ----------------------------------------------------------------------------
if __name__ == "__main__":
    # Inception(in_planes=4, n1x1=8, n3x3red=4, n3x3=8, n5x5red=4, n5x5=8,
    #           pool_planes=8), input (N, C, H, W) = (2, 4, 16, 16)
    in_planes, n1x1, n3x3red, n3x3, n5x5red, n5x5, pool_planes = 4, 8, 4, 8, 4, 8, 8
    N, H, W = 2, 16, 16
    cfg = dict(n1x1=n1x1, n3x3red=n3x3red, n3x3=n3x3,
               n5x5red=n5x5red, n5x5=n5x5, pool_planes=pool_planes)

    root = jax.random.PRNGKey(0)
    kx, kp = jax.random.split(root)
    x = jax.random.normal(kx, (N, in_planes, H, W), jnp.float32)   # NCHW input

    kparams, folded = make_inception_params(kp, in_planes, n1x1, n3x3red, n3x3,
                                            n5x5red, n5x5, pool_planes)

    out = jax.block_until_ready(inception_forward(x, kparams, cfg))
    ref = jax.block_until_ready(inception_reference(x, folded, cfg))

    assert out.shape == (N, n1x1 + n3x3 + n5x5 + pool_planes, H, W), out.shape
    # bf16 MXU inputs with f32 accumulation -> slightly looser tolerance than f32.
    err = float(jnp.max(jnp.abs(out - ref)))
    assert jnp.allclose(out, ref, rtol=2e-2, atol=2e-2), err

    print("KERNEL_OK")
</pallas_src>

<mosaic_0001>
module attributes {stable_mosaic.version = 11 : i64} {
  func.func @_inception_kernel(%arg0: i32, %arg1: memref<1x4x256xf32, #tpu.memory_space<vmem>>, %arg2: memref<16x4xbf16, #tpu.memory_space<vmem>>, %arg3: memref<16x1xf32, #tpu.memory_space<vmem>>, %arg4: memref<8x36xbf16, #tpu.memory_space<vmem>>, %arg5: memref<8x1xf32, #tpu.memory_space<vmem>>, %arg6: memref<8x36xbf16, #tpu.memory_space<vmem>>, %arg7: memref<8x1xf32, #tpu.memory_space<vmem>>, %arg8: memref<8x72xbf16, #tpu.memory_space<vmem>>, %arg9: memref<8x1xf32, #tpu.memory_space<vmem>>, %arg10: memref<8x4xbf16, #tpu.memory_space<vmem>>, %arg11: memref<8x1xf32, #tpu.memory_space<vmem>>, %arg12: memref<1x32x256xf32, #tpu.memory_space<vmem>>) attributes {dimension_semantics = [#tpu.dimension_semantics<parallel>], iteration_bounds = array<i64: 2>, scalar_prefetch = 0 : i64, scratch_operands = 0 : i64, tpu.core_type = #tpu.core_type<tc>, window_params = [{transform_indices = @transform_0, window_bounds = array<i64: 1, 4, 256>}, {pipeline_mode = #tpu.pipeline_mode<synchronous>, transform_indices = @transform_1, window_bounds = array<i64: 16, 4>}, {pipeline_mode = #tpu.pipeline_mode<synchronous>, transform_indices = @transform_2, window_bounds = array<i64: 16, 1>}, {pipeline_mode = #tpu.pipeline_mode<synchronous>, transform_indices = @transform_3, window_bounds = array<i64: 8, 36>}, {pipeline_mode = #tpu.pipeline_mode<synchronous>, transform_indices = @transform_4, window_bounds = array<i64: 8, 1>}, {pipeline_mode = #tpu.pipeline_mode<synchronous>, transform_indices = @transform_5, window_bounds = array<i64: 8, 36>}, {pipeline_mode = #tpu.pipeline_mode<synchronous>, transform_indices = @transform_6, window_bounds = array<i64: 8, 1>}, {pipeline_mode = #tpu.pipeline_mode<synchronous>, transform_indices = @transform_7, window_bounds = array<i64: 8, 72>}, {pipeline_mode = #tpu.pipeline_mode<synchronous>, transform_indices = @transform_8, window_bounds = array<i64: 8, 1>}, {pipeline_mode = #tpu.pipeline_mode<synchronous>, transform_indices = @transform_9, window_bounds = array<i64: 8, 4>}, {pipeline_mode = #tpu.pipeline_mode<synchronous>, transform_indices = @transform_10, window_bounds = array<i64: 8, 1>}, {transform_indices = @transform_11, window_bounds = array<i64: 1, 32, 256>}]} {
    %c0 = arith.constant 0 : index
    %c0_0 = arith.constant 0 : index
    %c0_1 = arith.constant 0 : index
    %0 = vector.load %arg1[%c0, %c0_0, %c0_1] : memref<1x4x256xf32, #tpu.memory_space<vmem>>, vector<1x4x256xf32>
    %1 = vector.shape_cast %0 : vector<1x4x256xf32> to vector<4x256xf32>
    %2 = tpu.iota {dimensions = array<i32: 1>} : vector<1x256xi32>
    %c16_i32 = arith.constant 16 : i32
    %c0_i32 = arith.constant 0 : i32
    %3 = arith.cmpi eq, %c16_i32, %c0_i32 : i32
    %c1_i32 = arith.constant 1 : i32
    %4 = arith.select %3, %c1_i32, %c16_i32 : i32
    %5 = vector.broadcast %4 : i32 to vector<1x256xi32>
    %6 = arith.remsi %2, %5 : vector<1x256xi32>
    %c0_i32_2 = arith.constant 0 : i32
    %7 = vector.broadcast %c0_i32_2 : i32 to vector<1x256xi32>
    %8 = arith.cmpi ne, %6, %7 : vector<1x256xi32>
    %c0_i32_3 = arith.constant 0 : i32
    %9 = vector.broadcast %c0_i32_3 : i32 to vector<1x256xi32>
    %10 = arith.cmpi slt, %6, %9 : vector<1x256xi32>
    %c0_i32_4 = arith.constant 0 : i32
    %11 = arith.cmpi slt, %4, %c0_i32_4 : i32
    %12 = vector.broadcast %11 : i1 to vector<1x256xi1>
    %13 = vector.broadcast %12 : vector<1x256xi1> to vector<1x256xi1>
    %14 = arith.xori %10, %13 : vector<1x256xi1>
    %15 = arith.andi %14, %8 : vector<1x256xi1>
    %16 = vector.broadcast %4 : i32 to vector<1x256xi32>
    %17 = arith.addi %6, %16 : vector<1x256xi32>
    %18 = arith.select %15, %17, %6 : vector<1x256xi1>, vector<1x256xi32>
    %c1_i32_5 = arith.constant 1 : i32
    %19 = vector.broadcast %c1_i32_5 : i32 to vector<1x256xi32>
    %20 = arith.cmpi sge, %18, %19 : vector<1x256xi32>
    %c14_i32 = arith.constant 14 : i32
    %21 = vector.broadcast %c14_i32 : i32 to vector<1x256xi32>
    %22 = arith.cmpi sle, %18, %21 : vector<1x256xi32>
    %c0_6 = arith.constant 0 : index
    %c0_7 = arith.constant 0 : index
    %23 = vector.load %arg2[%c0_6, %c0_7] : memref<16x4xbf16, #tpu.memory_space<vmem>>, vector<16x4xbf16>
    %24 = arith.truncf %1 : vector<4x256xf32> to vector<4x256xbf16>
    %cst = arith.constant dense<0.000000e+00> : vector<16x256xf32>
    %25 = tpu.matmul %23, %24, %cst {dimension_numbers = #tpu.dot_dimension_numbers<[1], [0], [0], [1], [0, 0, 1, 1], [], []>} : vector<16x4xbf16>, vector<4x256xbf16>, vector<16x256xf32> -> vector<16x256xf32>
    %c0_8 = arith.constant 0 : index
    %c0_9 = arith.constant 0 : index
    %26 = vector.load %arg3[%c0_8, %c0_9] : memref<16x1xf32, #tpu.memory_space<vmem>>, vector<16x1xf32>
    %27 = vector.broadcast %26 : vector<16x1xf32> to vector<16x256xf32>
    %28 = arith.addf %25, %27 : vector<16x256xf32>
    %cst_10 = arith.constant 0.000000e+00 : f32
    %29 = vector.broadcast %cst_10 : f32 to vector<16x256xf32>
    %30 = arith.maximumf %28, %29 : vector<16x256xf32>
    %31 = vector.extract_strided_slice %30 {offsets = [0, 0], sizes = [8, 256], strides = [1, 1]} : vector<16x256xf32> to vector<8x256xf32>
    %32 = vector.extract_strided_slice %30 {offsets = [8, 0], sizes = [4, 256], strides = [1, 1]} : vector<16x256xf32> to vector<4x256xf32>
    %cst_11 = arith.constant 0.000000e+00 : f32
    %33 = vector.broadcast %cst_11 : f32 to vector<4x17xf32>
    %34 = tpu.concatenate %33, %32, %33 in 1 : vector<4x17xf32>, vector<4x256xf32>, vector<4x17xf32> -> vector<4x290xf32>
    %35 = vector.extract_strided_slice %34 {offsets = [0, 0], sizes = [4, 256], strides = [1, 1]} : vector<4x290xf32> to vector<4x256xf32>
    %cst_12 = arith.constant 0.000000e+00 : f32
    %36 = vector.shape_cast %20 : vector<1x256xi1> to vector<1x256xi1>
    %37 = vector.broadcast %36 : vector<1x256xi1> to vector<4x256xi1>
    %38 = vector.broadcast %cst_12 : f32 to vector<4x256xf32>
    %39 = arith.select %37, %35, %38 : vector<4x256xi1>, vector<4x256xf32>
    %40 = vector.extract_strided_slice %34 {offsets = [0, 1], sizes = [4, 256], strides = [1, 1]} : vector<4x290xf32> to vector<4x256xf32>
    %41 = vector.extract_strided_slice %34 {offsets = [0, 2], sizes = [4, 256], strides = [1, 1]} : vector<4x290xf32> to vector<4x256xf32>
    %cst_13 = arith.constant 0.000000e+00 : f32
    %42 = vector.shape_cast %22 : vector<1x256xi1> to vector<1x256xi1>
    %43 = vector.broadcast %42 : vector<1x256xi1> to vector<4x256xi1>
    %44 = vector.broadcast %cst_13 : f32 to vector<4x256xf32>
    %45 = arith.select %43, %41, %44 : vector<4x256xi1>, vector<4x256xf32>
    %46 = vector.extract_strided_slice %34 {offsets = [0, 16], sizes = [4, 256], strides = [1, 1]} : vector<4x290xf32> to vector<4x256xf32>
    %cst_14 = arith.constant 0.000000e+00 : f32
    %47 = vector.shape_cast %20 : vector<1x256xi1> to vector<1x256xi1>
    %48 = vector.broadcast %47 : vector<1x256xi1> to vector<4x256xi1>
    %49 = vector.broadcast %cst_14 : f32 to vector<4x256xf32>
    %50 = arith.select %48, %46, %49 : vector<4x256xi1>, vector<4x256xf32>
    %51 = vector.extract_strided_slice %34 {offsets = [0, 17], sizes = [4, 256], strides = [1, 1]} : vector<4x290xf32> to vector<4x256xf32>
    %52 = vector.extract_strided_slice %34 {offsets = [0, 18], sizes = [4, 256], strides = [1, 1]} : vector<4x290xf32> to vector<4x256xf32>
    %cst_15 = arith.constant 0.000000e+00 : f32
    %53 = vector.shape_cast %22 : vector<1x256xi1> to vector<1x256xi1>
    %54 = vector.broadcast %53 : vector<1x256xi1> to vector<4x256xi1>
    %55 = vector.broadcast %cst_15 : f32 to vector<4x256xf32>
    %56 = arith.select %54, %52, %55 : vector<4x256xi1>, vector<4x256xf32>
    %57 = vector.extract_strided_slice %34 {offsets = [0, 32], sizes = [4, 256], strides = [1, 1]} : vector<4x290xf32> to vector<4x256xf32>
    %cst_16 = arith.constant 0.000000e+00 : f32
    %58 = vector.shape_cast %20 : vector<1x256xi1> to vector<1x256xi1>
    %59 = vector.broadcast %58 : vector<1x256xi1> to vector<4x256xi1>
    %60 = vector.broadcast %cst_16 : f32 to vector<4x256xf32>
    %61 = arith.select %59, %57, %60 : vector<4x256xi1>, vector<4x256xf32>
    %62 = vector.extract_strided_slice %34 {offsets = [0, 33], sizes = [4, 256], strides = [1, 1]} : vector<4x290xf32> to vector<4x256xf32>
    %63 = vector.extract_strided_slice %34 {offsets = [0, 34], sizes = [4, 256], strides = [1, 1]} : vector<4x290xf32> to vector<4x256xf32>
    %cst_17 = arith.constant 0.000000e+00 : f32
    %64 = vector.shape_cast %22 : vector<1x256xi1> to vector<1x256xi1>
    %65 = vector.broadcast %64 : vector<1x256xi1> to vector<4x256xi1>
    %66 = vector.broadcast %cst_17 : f32 to vector<4x256xf32>
    %67 = arith.select %65, %63, %66 : vector<4x256xi1>, vector<4x256xf32>
    %68 = tpu.concatenate %39, %40, %45, %50, %51, %56, %61, %62, %67 in 0 : vector<4x256xf32>, vector<4x256xf32>, vector<4x256xf32>, vector<4x256xf32>, vector<4x256xf32>, vector<4x256xf32>, vector<4x256xf32>, vector<4x256xf32>, vector<4x256xf32> -> vector<36x256xf32>
    %c0_18 = arith.constant 0 : index
    %c0_19 = arith.constant 0 : index
    %69 = vector.load %arg4[%c0_18, %c0_19] : memref<8x36xbf16, #tpu.memory_space<vmem>>, vector<8x36xbf16>
    %70 = arith.truncf %68 : vector<36x256xf32> to vector<36x256xbf16>
    %cst_20 = arith.constant dense<0.000000e+00> : vector<8x256xf32>
    %71 = tpu.matmul %69, %70, %cst_20 {dimension_numbers = #tpu.dot_dimension_numbers<[1], [0], [0], [1], [0, 0, 1, 1], [], []>} : vector<8x36xbf16>, vector<36x256xbf16>, vector<8x256xf32> -> vector<8x256xf32>
    %c0_21 = arith.constant 0 : index
    %c0_22 = arith.constant 0 : index
    %72 = vector.load %arg5[%c0_21, %c0_22] : memref<8x1xf32, #tpu.memory_space<vmem>>, vector<8x1xf32>
    %73 = vector.broadcast %72 : vector<8x1xf32> to vector<8x256xf32>
    %74 = arith.addf %71, %73 : vector<8x256xf32>
    %cst_23 = arith.constant 0.000000e+00 : f32
    %75 = vector.broadcast %cst_23 : f32 to vector<8x256xf32>
    %76 = arith.maximumf %74, %75 : vector<8x256xf32>
    %77 = vector.extract_strided_slice %30 {offsets = [12, 0], sizes = [4, 256], strides = [1, 1]} : vector<16x256xf32> to vector<4x256xf32>
    %cst_24 = arith.constant 0.000000e+00 : f32
    %78 = vector.broadcast %cst_24 : f32 to vector<4x17xf32>
    %79 = tpu.concatenate %78, %77, %78 in 1 : vector<4x17xf32>, vector<4x256xf32>, vector<4x17xf32> -> vector<4x290xf32>
    %80 = vector.extract_strided_slice %79 {offsets = [0, 0], sizes = [4, 256], strides = [1, 1]} : vector<4x290xf32> to vector<4x256xf32>
    %cst_25 = arith.constant 0.000000e+00 : f32
    %81 = vector.shape_cast %20 : vector<1x256xi1> to vector<1x256xi1>
    %82 = vector.broadcast %81 : vector<1x256xi1> to vector<4x256xi1>
    %83 = vector.broadcast %cst_25 : f32 to vector<4x256xf32>
    %84 = arith.select %82, %80, %83 : vector<4x256xi1>, vector<4x256xf32>
    %85 = vector.extract_strided_slice %79 {offsets = [0, 1], sizes = [4, 256], strides = [1, 1]} : vector<4x290xf32> to vector<4x256xf32>
    %86 = vector.extract_strided_slice %79 {offsets = [0, 2], sizes = [4, 256], strides = [1, 1]} : vector<4x290xf32> to vector<4x256xf32>
    %cst_26 = arith.constant 0.000000e+00 : f32
    %87 = vector.shape_cast %22 : vector<1x256xi1> to vector<1x256xi1>
    %88 = vector.broadcast %87 : vector<1x256xi1> to vector<4x256xi1>
    %89 = vector.broadcast %cst_26 : f32 to vector<4x256xf32>
    %90 = arith.select %88, %86, %89 : vector<4x256xi1>, vector<4x256xf32>
    %91 = vector.extract_strided_slice %79 {offsets = [0, 16], sizes = [4, 256], strides = [1, 1]} : vector<4x290xf32> to vector<4x256xf32>
    %cst_27 = arith.constant 0.000000e+00 : f32
    %92 = vector.shape_cast %20 : vector<1x256xi1> to vector<1x256xi1>
    %93 = vector.broadcast %92 : vector<1x256xi1> to vector<4x256xi1>
    %94 = vector.broadcast %cst_27 : f32 to vector<4x256xf32>
    %95 = arith.select %93, %91, %94 : vector<4x256xi1>, vector<4x256xf32>
    %96 = vector.extract_strided_slice %79 {offsets = [0, 17], sizes = [4, 256], strides = [1, 1]} : vector<4x290xf32> to vector<4x256xf32>
    %97 = vector.extract_strided_slice %79 {offsets = [0, 18], sizes = [4, 256], strides = [1, 1]} : vector<4x290xf32> to vector<4x256xf32>
    %cst_28 = arith.constant 0.000000e+00 : f32
    %98 = vector.shape_cast %22 : vector<1x256xi1> to vector<1x256xi1>
    %99 = vector.broadcast %98 : vector<1x256xi1> to vector<4x256xi1>
    %100 = vector.broadcast %cst_28 : f32 to vector<4x256xf32>
    %101 = arith.select %99, %97, %100 : vector<4x256xi1>, vector<4x256xf32>
    %102 = vector.extract_strided_slice %79 {offsets = [0, 32], sizes = [4, 256], strides = [1, 1]} : vector<4x290xf32> to vector<4x256xf32>
    %cst_29 = arith.constant 0.000000e+00 : f32
    %103 = vector.shape_cast %20 : vector<1x256xi1> to vector<1x256xi1>
    %104 = vector.broadcast %103 : vector<1x256xi1> to vector<4x256xi1>
    %105 = vector.broadcast %cst_29 : f32 to vector<4x256xf32>
    %106 = arith.select %104, %102, %105 : vector<4x256xi1>, vector<4x256xf32>
    %107 = vector.extract_strided_slice %79 {offsets = [0, 33], sizes = [4, 256], strides = [1, 1]} : vector<4x290xf32> to vector<4x256xf32>
    %108 = vector.extract_strided_slice %79 {offsets = [0, 34], sizes = [4, 256], strides = [1, 1]} : vector<4x290xf32> to vector<4x256xf32>
    %cst_30 = arith.constant 0.000000e+00 : f32
    %109 = vector.shape_cast %22 : vector<1x256xi1> to vector<1x256xi1>
    %110 = vector.broadcast %109 : vector<1x256xi1> to vector<4x256xi1>
    %111 = vector.broadcast %cst_30 : f32 to vector<4x256xf32>
    %112 = arith.select %110, %108, %111 : vector<4x256xi1>, vector<4x256xf32>
    %113 = tpu.concatenate %84, %85, %90, %95, %96, %101, %106, %107, %112 in 0 : vector<4x256xf32>, vector<4x256xf32>, vector<4x256xf32>, vector<4x256xf32>, vector<4x256xf32>, vector<4x256xf32>, vector<4x256xf32>, vector<4x256xf32>, vector<4x256xf32> -> vector<36x256xf32>
    %c0_31 = arith.constant 0 : index
    %c0_32 = arith.constant 0 : index
    %114 = vector.load %arg6[%c0_31, %c0_32] : memref<8x36xbf16, #tpu.memory_space<vmem>>, vector<8x36xbf16>
    %115 = arith.truncf %113 : vector<36x256xf32> to vector<36x256xbf16>
    %cst_33 = arith.constant dense<0.000000e+00> : vector<8x256xf32>
    %116 = tpu.matmul %114, %115, %cst_33 {dimension_numbers = #tpu.dot_dimension_numbers<[1], [0], [0], [1], [0, 0, 1, 1], [], []>} : vector<8x36xbf16>, vector<36x256xbf16>, vector<8x256xf32> -> vector<8x256xf32>
    %c0_34 = arith.constant 0 : index
    %c0_35 = arith.constant 0 : index
    %117 = vector.load %arg7[%c0_34, %c0_35] : memref<8x1xf32, #tpu.memory_space<vmem>>, vector<8x1xf32>
    %118 = vector.broadcast %117 : vector<8x1xf32> to vector<8x256xf32>
    %119 = arith.addf %116, %118 : vector<8x256xf32>
    %cst_36 = arith.constant 0.000000e+00 : f32
    %120 = vector.broadcast %cst_36 : f32 to vector<8x256xf32>
    %121 = arith.maximumf %119, %120 : vector<8x256xf32>
    %cst_37 = arith.constant 0.000000e+00 : f32
    %122 = vector.broadcast %cst_37 : f32 to vector<8x17xf32>
    %123 = tpu.concatenate %122, %121, %122 in 1 : vector<8x17xf32>, vector<8x256xf32>, vector<8x17xf32> -> vector<8x290xf32>
    %124 = vector.extract_strided_slice %123 {offsets = [0, 0], sizes = [8, 256], strides = [1, 1]} : vector<8x290xf32> to vector<8x256xf32>
    %cst_38 = arith.constant 0.000000e+00 : f32
    %125 = vector.shape_cast %20 : vector<1x256xi1> to vector<1x256xi1>
    %126 = vector.broadcast %125 : vector<1x256xi1> to vector<8x256xi1>
    %127 = vector.broadcast %cst_38 : f32 to vector<8x256xf32>
    %128 = arith.select %126, %124, %127 : vector<8x256xi1>, vector<8x256xf32>
    %129 = vector.extract_strided_slice %123 {offsets = [0, 1], sizes = [8, 256], strides = [1, 1]} : vector<8x290xf32> to vector<8x256xf32>
    %130 = vector.extract_strided_slice %123 {offsets = [0, 2], sizes = [8, 256], strides = [1, 1]} : vector<8x290xf32> to vector<8x256xf32>
    %cst_39 = arith.constant 0.000000e+00 : f32
    %131 = vector.shape_cast %22 : vector<1x256xi1> to vector<1x256xi1>
    %132 = vector.broadcast %131 : vector<1x256xi1> to vector<8x256xi1>
    %133 = vector.broadcast %cst_39 : f32 to vector<8x256xf32>
    %134 = arith.select %132, %130, %133 : vector<8x256xi1>, vector<8x256xf32>
    %135 = vector.extract_strided_slice %123 {offsets = [0, 16], sizes = [8, 256], strides = [1, 1]} : vector<8x290xf32> to vector<8x256xf32>
    %cst_40 = arith.constant 0.000000e+00 : f32
    %136 = vector.shape_cast %20 : vector<1x256xi1> to vector<1x256xi1>
    %137 = vector.broadcast %136 : vector<1x256xi1> to vector<8x256xi1>
    %138 = vector.broadcast %cst_40 : f32 to vector<8x256xf32>
    %139 = arith.select %137, %135, %138 : vector<8x256xi1>, vector<8x256xf32>
    %140 = vector.extract_strided_slice %123 {offsets = [0, 17], sizes = [8, 256], strides = [1, 1]} : vector<8x290xf32> to vector<8x256xf32>
    %141 = vector.extract_strided_slice %123 {offsets = [0, 18], sizes = [8, 256], strides = [1, 1]} : vector<8x290xf32> to vector<8x256xf32>
    %cst_41 = arith.constant 0.000000e+00 : f32
    %142 = vector.shape_cast %22 : vector<1x256xi1> to vector<1x256xi1>
    %143 = vector.broadcast %142 : vector<1x256xi1> to vector<8x256xi1>
    %144 = vector.broadcast %cst_41 : f32 to vector<8x256xf32>
    %145 = arith.select %143, %141, %144 : vector<8x256xi1>, vector<8x256xf32>
    %146 = vector.extract_strided_slice %123 {offsets = [0, 32], sizes = [8, 256], strides = [1, 1]} : vector<8x290xf32> to vector<8x256xf32>
    %cst_42 = arith.constant 0.000000e+00 : f32
    %147 = vector.shape_cast %20 : vector<1x256xi1> to vector<1x256xi1>
    %148 = vector.broadcast %147 : vector<1x256xi1> to vector<8x256xi1>
    %149 = vector.broadcast %cst_42 : f32 to vector<8x256xf32>
    %150 = arith.select %148, %146, %149 : vector<8x256xi1>, vector<8x256xf32>
    %151 = vector.extract_strided_slice %123 {offsets = [0, 33], sizes = [8, 256], strides = [1, 1]} : vector<8x290xf32> to vector<8x256xf32>
    %152 = vector.extract_strided_slice %123 {offsets = [0, 34], sizes = [8, 256], strides = [1, 1]} : vector<8x290xf32> to vector<8x256xf32>
    %cst_43 = arith.constant 0.000000e+00 : f32
    %153 = vector.shape_cast %22 : vector<1x256xi1> to vector<1x256xi1>
    %154 = vector.broadcast %153 : vector<1x256xi1> to vector<8x256xi1>
    %155 = vector.broadcast %cst_43 : f32 to vector<8x256xf32>
    %156 = arith.select %154, %152, %155 : vector<8x256xi1>, vector<8x256xf32>
    %157 = tpu.concatenate %128, %129, %134, %139, %140, %145, %150, %151, %156 in 0 : vector<8x256xf32>, vector<8x256xf32>, vector<8x256xf32>, vector<8x256xf32>, vector<8x256xf32>, vector<8x256xf32>, vector<8x256xf32>, vector<8x256xf32>, vector<8x256xf32> -> vector<72x256xf32>
    %c0_44 = arith.constant 0 : index
    %c0_45 = arith.constant 0 : index
    %158 = vector.load %arg8[%c0_44, %c0_45] : memref<8x72xbf16, #tpu.memory_space<vmem>>, vector<8x72xbf16>
    %159 = arith.truncf %157 : vector<72x256xf32> to vector<72x256xbf16>
    %cst_46 = arith.constant dense<0.000000e+00> : vector<8x256xf32>
    %160 = tpu.matmul %158, %159, %cst_46 {dimension_numbers = #tpu.dot_dimension_numbers<[1], [0], [0], [1], [0, 0, 1, 1], [], []>} : vector<8x72xbf16>, vector<72x256xbf16>, vector<8x256xf32> -> vector<8x256xf32>
    %c0_47 = arith.constant 0 : index
    %c0_48 = arith.constant 0 : index
    %161 = vector.load %arg9[%c0_47, %c0_48] : memref<8x1xf32, #tpu.memory_space<vmem>>, vector<8x1xf32>
    %162 = vector.broadcast %161 : vector<8x1xf32> to vector<8x256xf32>
    %163 = arith.addf %160, %162 : vector<8x256xf32>
    %cst_49 = arith.constant 0.000000e+00 : f32
    %164 = vector.broadcast %cst_49 : f32 to vector<8x256xf32>
    %165 = arith.maximumf %163, %164 : vector<8x256xf32>
    %cst_50 = arith.constant 0xFF800000 : f32
    %166 = vector.broadcast %cst_50 : f32 to vector<4x17xf32>
    %167 = tpu.concatenate %166, %1, %166 in 1 : vector<4x17xf32>, vector<4x256xf32>, vector<4x17xf32> -> vector<4x290xf32>
    %168 = vector.extract_strided_slice %167 {offsets = [0, 0], sizes = [4, 256], strides = [1, 1]} : vector<4x290xf32> to vector<4x256xf32>
    %cst_51 = arith.constant 0xFF800000 : f32
    %169 = vector.shape_cast %20 : vector<1x256xi1> to vector<1x256xi1>
    %170 = vector.broadcast %169 : vector<1x256xi1> to vector<4x256xi1>
    %171 = vector.broadcast %cst_51 : f32 to vector<4x256xf32>
    %172 = arith.select %170, %168, %171 : vector<4x256xi1>, vector<4x256xf32>
    %173 = vector.extract_strided_slice %167 {offsets = [0, 1], sizes = [4, 256], strides = [1, 1]} : vector<4x290xf32> to vector<4x256xf32>
    %174 = vector.extract_strided_slice %167 {offsets = [0, 2], sizes = [4, 256], strides = [1, 1]} : vector<4x290xf32> to vector<4x256xf32>
    %cst_52 = arith.constant 0xFF800000 : f32
    %175 = vector.shape_cast %22 : vector<1x256xi1> to vector<1x256xi1>
    %176 = vector.broadcast %175 : vector<1x256xi1> to vector<4x256xi1>
    %177 = vector.broadcast %cst_52 : f32 to vector<4x256xf32>
    %178 = arith.select %176, %174, %177 : vector<4x256xi1>, vector<4x256xf32>
    %179 = vector.extract_strided_slice %167 {offsets = [0, 16], sizes = [4, 256], strides = [1, 1]} : vector<4x290xf32> to vector<4x256xf32>
    %cst_53 = arith.constant 0xFF800000 : f32
    %180 = vector.shape_cast %20 : vector<1x256xi1> to vector<1x256xi1>
    %181 = vector.broadcast %180 : vector<1x256xi1> to vector<4x256xi1>
    %182 = vector.broadcast %cst_53 : f32 to vector<4x256xf32>
    %183 = arith.select %181, %179, %182 : vector<4x256xi1>, vector<4x256xf32>
    %184 = vector.extract_strided_slice %167 {offsets = [0, 17], sizes = [4, 256], strides = [1, 1]} : vector<4x290xf32> to vector<4x256xf32>
    %185 = vector.extract_strided_slice %167 {offsets = [0, 18], sizes = [4, 256], strides = [1, 1]} : vector<4x290xf32> to vector<4x256xf32>
    %cst_54 = arith.constant 0xFF800000 : f32
    %186 = vector.shape_cast %22 : vector<1x256xi1> to vector<1x256xi1>
    %187 = vector.broadcast %186 : vector<1x256xi1> to vector<4x256xi1>
    %188 = vector.broadcast %cst_54 : f32 to vector<4x256xf32>
    %189 = arith.select %187, %185, %188 : vector<4x256xi1>, vector<4x256xf32>
    %190 = vector.extract_strided_slice %167 {offsets = [0, 32], sizes = [4, 256], strides = [1, 1]} : vector<4x290xf32> to vector<4x256xf32>
    %cst_55 = arith.constant 0xFF800000 : f32
    %191 = vector.shape_cast %20 : vector<1x256xi1> to vector<1x256xi1>
    %192 = vector.broadcast %191 : vector<1x256xi1> to vector<4x256xi1>
    %193 = vector.broadcast %cst_55 : f32 to vector<4x256xf32>
    %194 = arith.select %192, %190, %193 : vector<4x256xi1>, vector<4x256xf32>
    %195 = vector.extract_strided_slice %167 {offsets = [0, 33], sizes = [4, 256], strides = [1, 1]} : vector<4x290xf32> to vector<4x256xf32>
    %196 = vector.extract_strided_slice %167 {offsets = [0, 34], sizes = [4, 256], strides = [1, 1]} : vector<4x290xf32> to vector<4x256xf32>
    %cst_56 = arith.constant 0xFF800000 : f32
    %197 = vector.shape_cast %22 : vector<1x256xi1> to vector<1x256xi1>
    %198 = vector.broadcast %197 : vector<1x256xi1> to vector<4x256xi1>
    %199 = vector.broadcast %cst_56 : f32 to vector<4x256xf32>
    %200 = arith.select %198, %196, %199 : vector<4x256xi1>, vector<4x256xf32>
    %201 = arith.maximumf %172, %173 : vector<4x256xf32>
    %202 = arith.maximumf %201, %178 : vector<4x256xf32>
    %203 = arith.maximumf %202, %183 : vector<4x256xf32>
    %204 = arith.maximumf %203, %184 : vector<4x256xf32>
    %205 = arith.maximumf %204, %189 : vector<4x256xf32>
    %206 = arith.maximumf %205, %194 : vector<4x256xf32>
    %207 = arith.maximumf %206, %195 : vector<4x256xf32>
    %208 = arith.maximumf %207, %200 : vector<4x256xf32>
    %c0_57 = arith.constant 0 : index
    %c0_58 = arith.constant 0 : index
    %209 = vector.load %arg10[%c0_57, %c0_58] : memref<8x4xbf16, #tpu.memory_space<vmem>>, vector<8x4xbf16>
    %210 = arith.truncf %208 : vector<4x256xf32> to vector<4x256xbf16>
    %cst_59 = arith.constant dense<0.000000e+00> : vector<8x256xf32>
    %211 = tpu.matmul %209, %210, %cst_59 {dimension_numbers = #tpu.dot_dimension_numbers<[1], [0], [0], [1], [0, 0, 1, 1], [], []>} : vector<8x4xbf16>, vector<4x256xbf16>, vector<8x256xf32> -> vector<8x256xf32>
    %c0_60 = arith.constant 0 : index
    %c0_61 = arith.constant 0 : index
    %212 = vector.load %arg11[%c0_60, %c0_61] : memref<8x1xf32, #tpu.memory_space<vmem>>, vector<8x1xf32>
    %213 = vector.broadcast %212 : vector<8x1xf32> to vector<8x256xf32>
    %214 = arith.addf %211, %213 : vector<8x256xf32>
    %cst_62 = arith.constant 0.000000e+00 : f32
    %215 = vector.broadcast %cst_62 : f32 to vector<8x256xf32>
    %216 = arith.maximumf %214, %215 : vector<8x256xf32>
    %217 = tpu.concatenate %31, %76, %165, %216 in 0 : vector<8x256xf32>, vector<8x256xf32>, vector<8x256xf32>, vector<8x256xf32> -> vector<32x256xf32>
    %c0_63 = arith.constant 0 : index
    %c0_64 = arith.constant 0 : index
    %c0_65 = arith.constant 0 : index
    %218 = vector.load %arg12[%c0_63, %c0_64, %c0_65] : memref<1x32x256xf32, #tpu.memory_space<vmem>>, vector<1x32x256xf32>
    %219 = vector.shape_cast %218 : vector<1x32x256xf32> to vector<32x256xf32>
    %220 = vector.shape_cast %217 : vector<32x256xf32> to vector<1x32x256xf32>
    tpu.vector_store %arg12[%c0_63, %c0_64, %c0_65], %220 {strides = array<i32>} : memref<1x32x256xf32, #tpu.memory_space<vmem>>, vector<1x32x256xf32>,
    return
  }
  func.func @transform_0(%arg0: i32) -> (i32, i32, i32) {
    %c0_i32 = arith.constant 0 : i32
    %c0_i32_0 = arith.constant 0 : i32
    %c0_i32_1 = arith.constant 0 : i32
    return %arg0, %c0_i32, %c0_i32_0 : i32, i32, i32
  }
  func.func @transform_1(%arg0: i32) -> (i32, i32) {
    %c0_i32 = arith.constant 0 : i32
    %c0_i32_0 = arith.constant 0 : i32
    %c0_i32_1 = arith.constant 0 : i32
    return %c0_i32, %c0_i32_0 : i32, i32
  }
  func.func @transform_2(%arg0: i32) -> (i32, i32) {
    %c0_i32 = arith.constant 0 : i32
    %c0_i32_0 = arith.constant 0 : i32
    %c0_i32_1 = arith.constant 0 : i32
    return %c0_i32, %c0_i32_0 : i32, i32
  }
  func.func @transform_3(%arg0: i32) -> (i32, i32) {
    %c0_i32 = arith.constant 0 : i32
    %c0_i32_0 = arith.constant 0 : i32
    %c0_i32_1 = arith.constant 0 : i32
    return %c0_i32, %c0_i32_0 : i32, i32
  }
  func.func @transform_4(%arg0: i32) -> (i32, i32) {
    %c0_i32 = arith.constant 0 : i32
    %c0_i32_0 = arith.constant 0 : i32
    %c0_i32_1 = arith.constant 0 : i32
    return %c0_i32, %c0_i32_0 : i32, i32
  }
  func.func @transform_5(%arg0: i32) -> (i32, i32) {
    %c0_i32 = arith.constant 0 : i32
    %c0_i32_0 = arith.constant 0 : i32
    %c0_i32_1 = arith.constant 0 : i32
    return %c0_i32, %c0_i32_0 : i32, i32
  }
  func.func @transform_6(%arg0: i32) -> (i32, i32) {
    %c0_i32 = arith.constant 0 : i32
    %c0_i32_0 = arith.constant 0 : i32
    %c0_i32_1 = arith.constant 0 : i32
    return %c0_i32, %c0_i32_0 : i32, i32
  }
  func.func @transform_7(%arg0: i32) -> (i32, i32) {
    %c0_i32 = arith.constant 0 : i32
    %c0_i32_0 = arith.constant 0 : i32
    %c0_i32_1 = arith.constant 0 : i32
    return %c0_i32, %c0_i32_0 : i32, i32
  }
  func.func @transform_8(%arg0: i32) -> (i32, i32) {
    %c0_i32 = arith.constant 0 : i32
    %c0_i32_0 = arith.constant 0 : i32
    %c0_i32_1 = arith.constant 0 : i32
    return %c0_i32, %c0_i32_0 : i32, i32
  }
  func.func @transform_9(%arg0: i32) -> (i32, i32) {
    %c0_i32 = arith.constant 0 : i32
    %c0_i32_0 = arith.constant 0 : i32
    %c0_i32_1 = arith.constant 0 : i32
    return %c0_i32, %c0_i32_0 : i32, i32
  }
  func.func @transform_10(%arg0: i32) -> (i32, i32) {
    %c0_i32 = arith.constant 0 : i32
    %c0_i32_0 = arith.constant 0 : i32
    %c0_i32_1 = arith.constant 0 : i32
    return %c0_i32, %c0_i32_0 : i32, i32
  }
  func.func @transform_11(%arg0: i32) -> (i32, i32, i32) {
    %c0_i32 = arith.constant 0 : i32
    %c0_i32_0 = arith.constant 0 : i32
    %c0_i32_1 = arith.constant 0 : i32
    return %arg0, %c0_i32, %c0_i32_0 : i32, i32, i32
  }
}

</mosaic_0001>

<llo_original>
// kernel: tpu_custom_call.1
$region0: #{tpu_custom_call.1}
  #allocation0 [shape = 'u32[]', space=smem, size = 0x4, offset = 0x4, fixed_abs, tag = 'smem constant byte address 0x4 - core index']
  #allocation1 [shape = 'u32[72,128]{1,0:T(1,128)}', space=vmem, size = 0x9000, scoped, tag = 'internal scratch']
  %s0 = inlined_call_operand.vmem [shape: f32[2,4,256], index: 0, kind: input, shape index: {}]
  %s1 = inlined_call_operand.vmem [shape: bf16[16,4], index: 1, kind: input, shape index: {}]
  %s2 = inlined_call_operand.vmem [shape: f32[16,1], index: 2, kind: input, shape index: {}]
  %s3 = inlined_call_operand.vmem [shape: bf16[8,36], index: 3, kind: input, shape index: {}]
  %s4 = inlined_call_operand.vmem [shape: f32[8,1], index: 4, kind: input, shape index: {}]
  %s5 = inlined_call_operand.vmem [shape: bf16[8,36], index: 5, kind: input, shape index: {}]
  %s6 = inlined_call_operand.vmem [shape: f32[8,1], index: 6, kind: input, shape index: {}]
  %s7 = inlined_call_operand.vmem [shape: bf16[8,72], index: 7, kind: input, shape index: {}]
  %s8 = inlined_call_operand.vmem [shape: f32[8,1], index: 8, kind: input, shape index: {}]
  %s9 = inlined_call_operand.vmem [shape: bf16[8,4], index: 9, kind: input, shape index: {}]
  %s10 = inlined_call_operand.vmem [shape: f32[8,1], index: 10, kind: input, shape index: {}]
  %s11 = inlined_call_operand.hbm [shape: f32[2,32,256], index: 11, kind: output, shape index: {}]
  %s12 = sld [smem:[#allocation0]]
  $region77: #{tpu_custom_call.1} parent=0
    _
  %s14 = ssub.s32 1, %s12
  %s15 = scalar_select 0, %s14, %s12
  $region1: #{tpu_custom_call.1} parent=0
    #allocation2 [shape = 'u8[65536]{0}', space=vmem, size = 0x10000, scoped, tag = 'output window, operand 0']
    #allocation3 [shape = 's32[2]{0}', space=sflag, size = 0x8, scoped, tag = 'scoped memory for tpu_custom_call.1']
    %16 = vsyncpa [#allocation3], 0
    %s17 = scalar_lea.sflag [#allocation3], 1
    %18 = vsyncpa %s17, 0
    loop: start=0, step=1, limit=4
    $region2: #{tpu_custom_call.1} parent=1 // loop_pre_header
      _
    $region3: #{tpu_custom_call.1} parent=1 // loop_header
      %s20 = sphi 0, %s24
      %p21 = scmp.ge.s32.totalorder %s20, 4
      %s30 = sphi 0, %s32
      %s33 = sphi 0, %s30
      %s34 = sphi 0, %s33
      %s50 = sphi 0, %s34
      %s54 = sphi 0, %s54
      %s56 = sphi 0, %s54
      %s57 = sphi 0, %s56
      %s71 = sphi 0, %s57
      %s75 = sphi 0, %s75
      %s77 = sphi 0, %s75
      %s78 = sphi 0, %s77
      %s92 = sphi 0, %s78
      %s96 = sphi 0, %s96
      %s98 = sphi 0, %s96
      %s99 = sphi 0, %s98
      %s113 = sphi 0, %s99
      %s117 = sphi 0, %s117
      %s119 = sphi 0, %s117
      %s120 = sphi 0, %s119
      %s134 = sphi 0, %s120
      %s138 = sphi 0, %s138
      %s140 = sphi 0, %s138
      %s141 = sphi 0, %s140
      %s155 = sphi 0, %s141
      %s159 = sphi 0, %s159
      %s161 = sphi 0, %s159
      %s162 = sphi 0, %s161
      %s176 = sphi 0, %s162
      %s180 = sphi 0, %s180
      %s182 = sphi 0, %s180
      %s183 = sphi 0, %s182
      %s197 = sphi 0, %s183
      %s201 = sphi 0, %s201
      %s203 = sphi 0, %s201
      %s204 = sphi 0, %s203
      %s218 = sphi 0, %s204
      %s222 = sphi 0, %s222
      %s224 = sphi 0, %s222
      %s225 = sphi 0, %s224
      %s239 = sphi 0, %s225
      %s243 = sphi 0, %s243
      %s245 = sphi 0, %s243
      %s246 = sphi 0, %s245
      %s260 = sphi 0, %s246
      %s266 = sphi 0, %s268
      %s269 = sphi 0, %s266
      %s270 = sphi 0, %s269
      %s286 = sphi 0, %s270
    $region4: #{tpu_custom_call.1} parent=1 // loop_header_branch
      %23 = sbr.rel (%p21) target = $region8
    $region5: #{tpu_custom_call.1} parent=1 // loop_body
      %s25 = ssub.s32 %s20, 1
      %s26 = ssub.s32 %s20, 2
      %s27 = sadd.s32 %s20, 1
      %s28 = ssub.s32 %s20, %s27
      %p29 = scmp.eq.s32.totalorder %s28, 0
      %s31 = sadd.s32 %s30, 1
      %s32 = scalar_select %p29, %s30, %s31
      %p35 = pneg %p29
      %p36 = scmp.eq.s32.totalorder %s20, 1
      %p37 = por %p35, %p36
      %p38 = scmp.ne.s32.totalorder %s30, %s33
      %p39 = scmp.eq.s32.totalorder %s20, 0
      %p40 = por %p38, %p39
      %p41 = scmp.ne.s32.totalorder %s30, %s33
      %p42 = scmp.eq.s32.totalorder %s25, 1
      %p43 = por %p41, %p42
      %p44 = scmp.ne.s32.totalorder %s33, %s34
      %p45 = scmp.eq.s32.totalorder %s25, 0
      %p46 = por %p44, %p45
      %p47 = scmp.ne.s32.totalorder %s33, %s34
      %p48 = scmp.eq.s32.totalorder %s26, 1
      %p49 = por %p47, %p48
      %p51 = scmp.ne.s32.totalorder %s34, %s50
      %p52 = scmp.eq.s32.totalorder %s26, 0
      %p53 = por %p51, %p52
      %s55 = sadd.s32 %s54, 1
      %p58 = scmp.eq.s32.totalorder %s20, 1
      %p59 = scmp.ne.s32.totalorder %s54, %s56
      %p60 = scmp.eq.s32.totalorder %s20, 0
      %p61 = por %p59, %p60
      %p62 = scmp.ne.s32.totalorder %s54, %s56
      %p63 = scmp.eq.s32.totalorder %s25, 1
      %p64 = por %p62, %p63
      %p65 = scmp.ne.s32.totalorder %s56, %s57
      %p66 = scmp.eq.s32.totalorder %s25, 0
      %p67 = por %p65, %p66
      %p68 = scmp.ne.s32.totalorder %s56, %s57
      %p69 = scmp.eq.s32.totalorder %s26, 1
      %p70 = por %p68, %p69
      %p72 = scmp.ne.s32.totalorder %s57, %s71
      %p73 = scmp.eq.s32.totalorder %s26, 0
      %p74 = por %p72, %p73
      %s76 = sadd.s32 %s75, 1
      %p79 = scmp.eq.s32.totalorder %s20, 1
      %p80 = scmp.ne.s32.totalorder %s75, %s77
      %p81 = scmp.eq.s32.totalorder %s20, 0
      %p82 = por %p80, %p81
      %p83 = scmp.ne.s32.totalorder %s75, %s77
      %p84 = scmp.eq.s32.totalorder %s25, 1
      %p85 = por %p83, %p84
      %p86 = scmp.ne.s32.totalorder %s77, %s78
      %p87 = scmp.eq.s32.totalorder %s25, 0
      %p88 = por %p86, %p87
      %p89 = scmp.ne.s32.totalorder %s77, %s78
      %p90 = scmp.eq.s32.totalorder %s26, 1
      %p91 = por %p89, %p90
      %p93 = scmp.ne.s32.totalorder %s78, %s92
      %p94 = scmp.eq.s32.totalorder %s26, 0
      %p95 = por %p93, %p94
      %s97 = sadd.s32 %s96, 1
      %p100 = scmp.eq.s32.totalorder %s20, 1
      %p101 = scmp.ne.s32.totalorder %s96, %s98
      %p102 = scmp.eq.s32.totalorder %s20, 0
      %p103 = por %p101, %p102
      %p104 = scmp.ne.s32.totalorder %s96, %s98
      %p105 = scmp.eq.s32.totalorder %s25, 1
      %p106 = por %p104, %p105
      %p107 = scmp.ne.s32.totalorder %s98, %s99
      %p108 = scmp.eq.s32.totalorder %s25, 0
      %p109 = por %p107, %p108
      %p110 = scmp.ne.s32.totalorder %s98, %s99
      %p111 = scmp.eq.s32.totalorder %s26, 1
      %p112 = por %p110, %p111
      %p114 = scmp.ne.s32.totalorder %s99, %s113
      %p115 = scmp.eq.s32.totalorder %s26, 0
      %p116 = por %p114, %p115
      %s118 = sadd.s32 %s117, 1
      %p121 = scmp.eq.s32.totalorder %s20, 1
      %p122 = scmp.ne.s32.totalorder %s117, %s119
      %p123 = scmp.eq.s32.totalorder %s20, 0
      %p124 = por %p122, %p123
      %p125 = scmp.ne.s32.totalorder %s117, %s119
      %p126 = scmp.eq.s32.totalorder %s25, 1
      %p127 = por %p125, %p126
      %p128 = scmp.ne.s32.totalorder %s119, %s120
      %p129 = scmp.eq.s32.totalorder %s25, 0
      %p130 = por %p128, %p129
      %p131 = scmp.ne.s32.totalorder %s119, %s120
      %p132 = scmp.eq.s32.totalorder %s26, 1
      %p133 = por %p131, %p132
      %p135 = scmp.ne.s32.totalorder %s120, %s134
      %p136 = scmp.eq.s32.totalorder %s26, 0
      %p137 = por %p135, %p136
      %s139 = sadd.s32 %s138, 1
      %p142 = scmp.eq.s32.totalorder %s20, 1
      %p143 = scmp.ne.s32.totalorder %s138, %s140
      %p144 = scmp.eq.s32.totalorder %s20, 0
      %p145 = por %p143, %p144
      %p146 = scmp.ne.s32.totalorder %s138, %s140
      %p147 = scmp.eq.s32.totalorder %s25, 1
      %p148 = por %p146, %p147
      %p149 = scmp.ne.s32.totalorder %s140, %s141
      %p150 = scmp.eq.s32.totalorder %s25, 0
      %p151 = por %p149, %p150
      %p152 = scmp.ne.s32.totalorder %s140, %s141
      %p153 = scmp.eq.s32.totalorder %s26, 1
      %p154 = por %p152, %p153
      %p156 = scmp.ne.s32.totalorder %s141, %s155
      %p157 = scmp.eq.s32.totalorder %s26, 0
      %p158 = por %p156, %p157
      %s160 = sadd.s32 %s159, 1
      %p163 = scmp.eq.s32.totalorder %s20, 1
      %p164 = scmp.ne.s32.totalorder %s159, %s161
      %p165 = scmp.eq.s32.totalorder %s20, 0
      %p166 = por %p164, %p165
      %p167 = scmp.ne.s32.totalorder %s159, %s161
      %p168 = scmp.eq.s32.totalorder %s25, 1
      %p169 = por %p167, %p168
      %p170 = scmp.ne.s32.totalorder %s161, %s162
      %p171 = scmp.eq.s32.totalorder %s25, 0
      %p172 = por %p170, %p171
      %p173 = scmp.ne.s32.totalorder %s161, %s162
      %p174 = scmp.eq.s32.totalorder %s26, 1
      %p175 = por %p173, %p174
      %p177 = scmp.ne.s32.totalorder %s162, %s176
      %p178 = scmp.eq.s32.totalorder %s26, 0
      %p179 = por %p177, %p178
      %s181 = sadd.s32 %s180, 1
      %p184 = scmp.eq.s32.totalorder %s20, 1
      %p185 = scmp.ne.s32.totalorder %s180, %s182
      %p186 = scmp.eq.s32.totalorder %s20, 0
      %p187 = por %p185, %p186
      %p188 = scmp.ne.s32.totalorder %s180, %s182
      %p189 = scmp.eq.s32.totalorder %s25, 1
      %p190 = por %p188, %p189
      %p191 = scmp.ne.s32.totalorder %s182, %s183
      %p192 = scmp.eq.s32.totalorder %s25, 0
      %p193 = por %p191, %p192
      %p194 = scmp.ne.s32.totalorder %s182, %s183
      %p195 = scmp.eq.s32.totalorder %s26, 1
      %p196 = por %p194, %p195
      %p198 = scmp.ne.s32.totalorder %s183, %s197
      %p199 = scmp.eq.s32.totalorder %s26, 0
      %p200 = por %p198, %p199
      %s202 = sadd.s32 %s201, 1
      %p205 = scmp.eq.s32.totalorder %s20, 1
      %p206 = scmp.ne.s32.totalorder %s201, %s203
      %p207 = scmp.eq.s32.totalorder %s20, 0
      %p208 = por %p206, %p207
      %p209 = scmp.ne.s32.totalorder %s201, %s203
      %p210 = scmp.eq.s32.totalorder %s25, 1
      %p211 = por %p209, %p210
      %p212 = scmp.ne.s32.totalorder %s203, %s204
      %p213 = scmp.eq.s32.totalorder %s25, 0
      %p214 = por %p212, %p213
      %p215 = scmp.ne.s32.totalorder %s203, %s204
      %p216 = scmp.eq.s32.totalorder %s26, 1
      %p217 = por %p215, %p216
      %p219 = scmp.ne.s32.totalorder %s204, %s218
      %p220 = scmp.eq.s32.totalorder %s26, 0
      %p221 = por %p219, %p220
      %s223 = sadd.s32 %s222, 1
      %p226 = scmp.eq.s32.totalorder %s20, 1
      %p227 = scmp.ne.s32.totalorder %s222, %s224
      %p228 = scmp.eq.s32.totalorder %s20, 0
      %p229 = por %p227, %p228
      %p230 = scmp.ne.s32.totalorder %s222, %s224
      %p231 = scmp.eq.s32.totalorder %s25, 1
      %p232 = por %p230, %p231
      %p233 = scmp.ne.s32.totalorder %s224, %s225
      %p234 = scmp.eq.s32.totalorder %s25, 0
      %p235 = por %p233, %p234
      %p236 = scmp.ne.s32.totalorder %s224, %s225
      %p237 = scmp.eq.s32.totalorder %s26, 1
      %p238 = por %p236, %p237
      %p240 = scmp.ne.s32.totalorder %s225, %s239
      %p241 = scmp.eq.s32.totalorder %s26, 0
      %p242 = por %p240, %p241
      %s244 = sadd.s32 %s243, 1
      %p247 = scmp.eq.s32.totalorder %s20, 1
      %p248 = scmp.ne.s32.totalorder %s243, %s245
      %p249 = scmp.eq.s32.totalorder %s20, 0
      %p250 = por %p248, %p249
      %p251 = scmp.ne.s32.totalorder %s243, %s245
      %p252 = scmp.eq.s32.totalorder %s25, 1
      %p253 = por %p251, %p252
      %p254 = scmp.ne.s32.totalorder %s245, %s246
      %p255 = scmp.eq.s32.totalorder %s25, 0
      %p256 = por %p254, %p255
      %p257 = scmp.ne.s32.totalorder %s245, %s246
      %p258 = scmp.eq.s32.totalorder %s26, 1
      %p259 = por %p257, %p258
      %p261 = scmp.ne.s32.totalorder %s246, %s260
      %p262 = scmp.eq.s32.totalorder %s26, 0
      %p263 = por %p261, %p262
      %s264 = ssub.s32 %s20, %s27
      %p265 = scmp.eq.s32.totalorder %s264, 0
      %s267 = sadd.s32 %s266, 1
      %s268 = scalar_select %p265, %s266, %s267
      %p271 = pneg %p265
      %p272 = scmp.eq.s32.totalorder %s20, 1
      %p273 = por %p271, %p272
      %p274 = scmp.ne.s32.totalorder %s266, %s269
      %p275 = scmp.eq.s32.totalorder %s20, 0
      %p276 = por %p274, %p275
      %p277 = scmp.ne.s32.totalorder %s266, %s269
      %p278 = scmp.eq.s32.totalorder %s25, 1
      %p279 = por %p277, %p278
      %p280 = scmp.ne.s32.totalorder %s269, %s270
      %p281 = scmp.eq.s32.totalorder %s25, 0
      %p282 = por %p280, %p281
      %p283 = scmp.ne.s32.totalorder %s269, %s270
      %p284 = scmp.eq.s32.totalorder %s26, 1
      %p285 = por %p283, %p284
      %p287 = scmp.ne.s32.totalorder %s270, %s286
      %p288 = scmp.eq.s32.totalorder %s26, 0
      %p289 = por %p287, %p288
      %p290 = scmp.le.s32.totalorder 1, %s20
      %p291 = scmp.lt.s32.totalorder %s20, 3
      %p292 = pnand %p290, %p291
      %p293 = pneg %p292
      // Predicated region
      $region9: #{tpu_custom_call.1} parent=5 // pred_check
        _
      $region10: #{tpu_custom_call.1} parent=5 // pred_check_branch
        %295 = sbr.rel (%p292) target = $region12
      $region11: #{tpu_custom_call.1} parent=5 // pred_region
        %s296 = ssub.s32 %s20, 1
        // Predicated region
        $region13: #{tpu_custom_call.1} parent=11 // pred_check
          %p297 = pneg %p67
        $region14: #{tpu_custom_call.1} parent=11 // pred_check_branch
          %299 = sbr.rel (%p297) target = $region16
        $region15: #{tpu_custom_call.1} parent=11 // pred_region
          _
        $region16: #{tpu_custom_call.1} parent=11 // pred_fallthru
          _
        // Predicated region
        $region17: #{tpu_custom_call.1} parent=11 // pred_check
          %p300 = pneg %p88
        $region18: #{tpu_custom_call.1} parent=11 // pred_check_branch
          %302 = sbr.rel (%p300) target = $region20
        $region19: #{tpu_custom_call.1} parent=11 // pred_region
          _
        $region20: #{tpu_custom_call.1} parent=11 // pred_fallthru
          _
        // Predicated region
        $region21: #{tpu_custom_call.1} parent=11 // pred_check
          %p303 = pneg %p109
        $region22: #{tpu_custom_call.1} parent=11 // pred_check_branch
          %305 = sbr.rel (%p303) target = $region24
        $region23: #{tpu_custom_call.1} parent=11 // pred_region
          _
        $region24: #{tpu_custom_call.1} parent=11 // pred_fallthru
          _
        // Predicated region
        $region25: #{tpu_custom_call.1} parent=11 // pred_check
          %p306 = pneg %p130
        $region26: #{tpu_custom_call.1} parent=11 // pred_check_branch
          %308 = sbr.rel (%p306) target = $region28
        $region27: #{tpu_custom_call.1} parent=11 // pred_region
          _
        $region28: #{tpu_custom_call.1} parent=11 // pred_fallthru
          _
        // Predicated region
        $region29: #{tpu_custom_call.1} parent=11 // pred_check
          %p309 = pneg %p151
        $region30: #{tpu_custom_call.1} parent=11 // pred_check_branch
          %311 = sbr.rel (%p309) target = $region32
        $region31: #{tpu_custom_call.1} parent=11 // pred_region
          _
        $region32: #{tpu_custom_call.1} parent=11 // pred_fallthru
          _
        // Predicated region
        $region33: #{tpu_custom_call.1} parent=11 // pred_check
          %p312 = pneg %p172
        $region34: #{tpu_custom_call.1} parent=11 // pred_check_branch
          %314 = sbr.rel (%p312) target = $region36
        $region35: #{tpu_custom_call.1} parent=11 // pred_region
          _
        $region36: #{tpu_custom_call.1} parent=11 // pred_fallthru
          _
        // Predicated region
        $region37: #{tpu_custom_call.1} parent=11 // pred_check
          %p315 = pneg %p193
        $region38: #{tpu_custom_call.1} parent=11 // pred_check_branch
          %317 = sbr.rel (%p315) target = $region40
        $region39: #{tpu_custom_call.1} parent=11 // pred_region
          _
        $region40: #{tpu_custom_call.1} parent=11 // pred_fallthru
          _
        // Predicated region
        $region41: #{tpu_custom_call.1} parent=11 // pred_check
          %p318 = pneg %p214
        $region42: #{tpu_custom_call.1} parent=11 // pred_check_branch
          %320 = sbr.rel (%p318) target = $region44
        $region43: #{tpu_custom_call.1} parent=11 // pred_region
          _
        $region44: #{tpu_custom_call.1} parent=11 // pred_fallthru
          _
        // Predicated region
        $region45: #{tpu_custom_call.1} parent=11 // pred_check
          %p321 = pneg %p235
        $region46: #{tpu_custom_call.1} parent=11 // pred_check_branch
          %323 = sbr.rel (%p321) target = $region48
        $region47: #{tpu_custom_call.1} parent=11 // pred_region
          _
        $region48: #{tpu_custom_call.1} parent=11 // pred_fallthru
          _
        // Predicated region
        $region49: #{tpu_custom_call.1} parent=11 // pred_check
          %p324 = pneg %p256
        $region50: #{tpu_custom_call.1} parent=11 // pred_check_branch
          %326 = sbr.rel (%p324) target = $region52
        $region51: #{tpu_custom_call.1} parent=11 // pred_region
          _
        $region52: #{tpu_custom_call.1} parent=11 // pred_fallthru
          _
      $region12: #{tpu_custom_call.1} parent=5 // pred_fallthru
        _
      %p327 = scmp.lt.s32.totalorder %s20, 2
      // Predicated region
      $region53: #{tpu_custom_call.1} parent=5 // pred_check
        %p328 = pneg %p327
      $region54: #{tpu_custom_call.1} parent=5 // pred_check_branch
        %330 = sbr.rel (%p328) target = $region56
      $region55: #{tpu_custom_call.1} parent=5 // pred_region
        // Predicated region
        $region57: #{tpu_custom_call.1} parent=55 // pred_check
          %p331 = pneg %p40
        $region58: #{tpu_custom_call.1} parent=55 // pred_check_branch
          %333 = sbr.rel (%p331) target = $region60
        $region59: #{tpu_custom_call.1} parent=55 // pred_region
          %p334 = scmp.lt.s32.totalorder %s20, 1
          %s335 = scalar_select %p334, %s20, 1
          %s336 = smul.addr %s335, 2
          %s337 = smul.addr %s336, 4
          %s338 = scalar_lea.vmem %s0, %s337
        $region60: #{tpu_custom_call.1} parent=55 // pred_fallthru
          _
      $region56: #{tpu_custom_call.1} parent=5 // pred_fallthru
        _
      %p339 = scmp.le.s32.totalorder 1, %s20
      %p340 = scmp.lt.s32.totalorder %s20, 3
      %p341 = pnand %p339, %p340
      %p342 = pneg %p341
      // Predicated region
      $region61: #{tpu_custom_call.1} parent=5 // pred_check
        _
      $region62: #{tpu_custom_call.1} parent=5 // pred_check_branch
        %344 = sbr.rel (%p341) target = $region64
      $region63: #{tpu_custom_call.1} parent=5 // pred_region
        %s345 = ssub.s32 %s20, 1
        %p346 = scmp.lt.s32.totalorder %s25, 1
        %s347 = scalar_select %p346, %s25, 1
        %s348 = smul.addr %s347, 2
        %s349 = smul.addr %s348, 4
        %s350 = scalar_lea.vmem %s0, %s349
        %p351 = pneg %p46
        %p352 = pneg %p43
        %p353 = pneg %p67
        %p354 = pneg %p64
        %p355 = pneg %p88
        %p356 = pneg %p85
        %p357 = pneg %p109
        %p358 = pneg %p106
        %p359 = pneg %p130
        %p360 = pneg %p127
        %p361 = pneg %p151
        %p362 = pneg %p148
        %p363 = pneg %p172
        %p364 = pneg %p169
        %p365 = pneg %p193
        %p366 = pneg %p190
        %p367 = pneg %p214
        %p368 = pneg %p211
        %p369 = pneg %p235
        %p370 = pneg %p232
        %p371 = pneg %p256
        %p372 = pneg %p253
        %p373 = pneg %p282
        %p374 = pneg %p279
        %s375 = sand.u32 %s269, 1
        %s376 = scalar_lea.sflag [#allocation3], %s375
        %s377 = sand.u32 %s269, 1
        %s378 = smul.addr %s377, 64
        %s379 = scalar_lea.vmem [#allocation2], %s378
        %p380 = scmp.lt.s32.totalorder %s25, 1
        %s381 = scalar_select %p380, %s25, 1
        %s382 = smul.addr %s381, 2
        %s383 = smul.addr %s382, 4
        %s384 = scalar_lea.vmem %s0, %s383
        %v386 = vld [vmem:[%s384] sm:$0xff]
        %v387 = vlaneseq
        %v388 = vand.u32 %v387, 127
        %v389 = vadd.s32 %v388, 128
        %vm390 = vcmp.lt.s32.totalorder %v388, 0
        %v391 = vsub.s32 0, %v388
        %v392 = vsel %vm390, %v391, %v388
        %v393 = vshrl.u32 %v392, 4
        %v394 = vand.u32 %v392, 15
        %v395 = vsub.s32 0, %v394
        %v396 = vsel %vm390, %v395, %v394
        %vm397 = vcmp.lt.s32.totalorder %v389, 0
        %v398 = vsub.s32 0, %v389
        %v399 = vsel %vm397, %v398, %v389
        %v400 = vshrl.u32 %v399, 4
        %v401 = vand.u32 %v399, 15
        %v402 = vsub.s32 0, %v401
        %v403 = vsel %vm397, %v402, %v401
        %vm404 = vcmp.ne.s32.totalorder %v396, 0
        %vm405 = vcmp.ne.s32.totalorder %v403, 0
        %vm406 = vcmp.lt.s32.totalorder %v396, 0
        %vm407 = vcmp.lt.s32.totalorder %v403, 0
        %vm408 = vmand %vm406, %vm404
        %vm409 = vmand %vm407, %vm405
        %v410 = vadd.s32 %v396, 16
        %v411 = vadd.s32 %v403, 16
        %v412 = vsel %vm408, %v410, %v396
        %v413 = vsel %vm409, %v411, %v403
        %vm414 = vcmp.ge.s32.totalorder %v412, 1
        %vm415 = vcmp.ge.s32.totalorder %v413, 1
        %vm416 = vcmp.le.s32.totalorder %v412, 14
        %vm417 = vcmp.le.s32.totalorder %v413, 14
        %v418 = vld [vmem:[%s1] sm:$0xf]
        %v419 = vld [vmem:[%s1 + $0x4] sm:$0xf]
        %421 = vst [vmem:[#allocation1] ss:$2 sm:$0xff] %v386
        %v422 = vld.sshfl [vmem:[#allocation1] sm:$0xff pattern:$0x75316420]
        %v423 = vld.sshfl [vmem:[#allocation1 + $0x8] sm:$0xff pattern:$0x75316420]
        %v426 = vpack.c.bf16 %v422, %v422
        %v427 = vpack.c.bf16 %v423, %v423
        %v428 = vld [vmem:[%s2] sm:$0xff]
        %v429 = vld [vmem:[%s2 + $0x8] sm:$0xff]
        %431 = vset.pattern.permute.xlu0 0
        %432 = vperm.xlu0 %431, %v428
        %v433 = vpop.permute.xlu0 %432
        %436 = vset.pattern.permute.xlu0 0
        %437 = vperm.xlu0 %436, %v429
        %v438 = vpop.permute.xlu0 %437
        %v442 = vunpack.c.l.b16 %v418
        %v443 = vunpack.c.l.b16 %v419
        %v444 = vpack.c.b16 %v443, %v442
        %vm445 = vcmask 31744
        %v447 = vsel %vm445, %v444, 0
        %vm449 = vcmask 1041408
        %v451 = vsel %vm449, %v426, 0
        %v454 = vsel %vm449, %v427, 0
        %456 = vmatpush.bf16.msra.mxu0 0
        %457 = vmatpush.bf16.msra.mxu0 0
        %458 = vmatpush.bf16.msra.mxu0 0
        %459 = vmatpush.bf16.msra.mxu0 0
        %460 = vmatpush.bf16.msra.mxu0 0
        %461 = vmatpush.bf16.msra.mxu0 0
        %462 = vmatpush.bf16.msra.mxu0 0
        %463 = vmatpush.bf16.msra.mxu0 %v451
        %464 = vmatmul.bf16.gmra.mxu0 %v447
        %v465 = vpop.f32.mrf.mxu0
        %v466 = vadd.f32 %v433, %v465
        %v467 = vpop.f32.mrf.mxu0
        %v468 = vadd.f32 %v438, %v467
        %469 = vdwg.mxu0
        %470 = vmatpush.bf16.msra.mxu0 0
        %471 = vmatpush.bf16.msra.mxu0 0
        %472 = vmatpush.bf16.msra.mxu0 0
        %473 = vmatpush.bf16.msra.mxu0 0
        %474 = vmatpush.bf16.msra.mxu0 0
        %475 = vmatpush.bf16.msra.mxu0 0
        %476 = vmatpush.bf16.msra.mxu0 0
        %477 = vmatpush.bf16.msra.mxu0 %v454
        %478 = vmatmul.bf16.gmra.mxu0 %v447
        %v479 = vpop.f32.mrf.mxu0
        %v480 = vadd.f32 %v433, %v479
        %v481 = vpop.f32.mrf.mxu0
        %v482 = vadd.f32 %v438, %v481
        %483 = vdwg.mxu0
        %v484 = vmax.f32 %v466, 0.0
        %v485 = vmax.f32 %v480, 0.0
        %v486 = vmax.f32 %v468, 0.0
        %v487 = vmax.f32 %v482, 0.0
        %490 = vrot.lane.b32.xlu0 %v486, 17
        %v491 = vpop.permute.xlu0 %490
        %492 = vrot.lane.b32.xlu0 %v487, 17
        %v493 = vpop.permute.xlu0 %492
        %vm494 = vcmask 138240
        %v495 = vsel %vm494, %v491, %v493
        %v499 = vsel %vm494, 0.0, %v491
        %v500 = vsel %vm494, %v493, 0.0
        %v501 = vsel %vm414, 1, 0
        %v502 = vsel %vm415, 1, 0
        %vm503 = vcmp.eq.s32.totalorder %v501, 1
        %vm504 = vcmp.eq.s32.totalorder %v502, 1
        %v505 = vsel %vm503, %v499, 0.0
        %v506 = vsel %vm504, %v495, 0.0
        %v507 = vsel %vm416, 1, 0
        %v508 = vsel %vm417, 1, 0
        %vm509 = vcmp.eq.s32.totalorder %v507, 1
        %vm510 = vcmp.eq.s32.totalorder %v508, 1
        %513 = vrot.lane.b32.xlu0 %v499, 126
        %v514 = vpop.permute.xlu0 %513
        %515 = vrot.lane.b32.xlu0 %v495, 126
        %v516 = vpop.permute.xlu0 %515
        %517 = vrot.lane.b32.xlu0 %v500, 126
        %v518 = vpop.permute.xlu0 %517
        %vm519 = vcmask 1031168
        %v520 = vsel %vm519, %v514, %v516
        %v521 = vsel %vm519, %v516, %v518
        %v524 = vsel %vm509, %v520, 0.0
        %v525 = vsel %vm510, %v521, 0.0
        %526 = vrot.lane.b32.xlu0 %v499, 112
        %v527 = vpop.permute.xlu0 %526
        %528 = vrot.lane.b32.xlu0 %v495, 112
        %v529 = vpop.permute.xlu0 %528
        %530 = vrot.lane.b32.xlu0 %v500, 112
        %v531 = vpop.permute.xlu0 %530
        %vm532 = vcmask 916480
        %v533 = vsel %vm532, %v527, %v529
        %v534 = vsel %vm532, %v529, %v531
        %v537 = vsel %vm503, %v533, 0.0
        %v538 = vsel %vm504, %v534, 0.0
        %539 = vrot.lane.b32.xlu0 %v499, 110
        %v540 = vpop.permute.xlu0 %539
        %541 = vrot.lane.b32.xlu0 %v495, 110
        %v542 = vpop.permute.xlu0 %541
        %543 = vrot.lane.b32.xlu0 %v500, 110
        %v544 = vpop.permute.xlu0 %543
        %vm545 = vcmask 900096
        %v546 = vsel %vm545, %v540, %v542
        %v547 = vsel %vm545, %v542, %v544
        %v550 = vsel %vm509, %v546, 0.0
        %v551 = vsel %vm510, %v547, 0.0
        %552 = vrot.lane.b32.xlu0 %v499, 96
        %v553 = vpop.permute.xlu0 %552
        %554 = vrot.lane.b32.xlu0 %v495, 96
        %v555 = vpop.permute.xlu0 %554
        %556 = vrot.lane.b32.xlu0 %v500, 96
        %v557 = vpop.permute.xlu0 %556
        %vm558 = vcmask 785408
        %v559 = vsel %vm558, %v553, %v555
        %v560 = vsel %vm558, %v555, %v557
        %v563 = vsel %vm503, %v559, 0.0
        %v564 = vsel %vm504, %v560, 0.0
        %565 = vrot.lane.b32.xlu0 %v499, 94
        %v566 = vpop.permute.xlu0 %565
        %567 = vrot.lane.b32.xlu0 %v495, 94
        %v568 = vpop.permute.xlu0 %567
        %569 = vrot.lane.b32.xlu0 %v500, 94
        %v570 = vpop.permute.xlu0 %569
        %vm571 = vcmask 769024
        %v572 = vsel %vm571, %v566, %v568
        %v573 = vsel %vm571, %v568, %v570
        %v576 = vsel %vm509, %v572, 0.0
        %v577 = vsel %vm510, %v573, 0.0
        %v578 = vrot.slane %v499, 4
        %v579 = vrot.slane %v495, 4
        %v580 = vrot.slane %v500, 4
        %581 = vrot.lane.b32.xlu0 %v578, 127
        %v582 = vpop.permute.xlu0 %581
        %583 = vrot.lane.b32.xlu0 %v579, 127
        %v584 = vpop.permute.xlu0 %583
        %585 = vrot.lane.b32.xlu0 %v580, 127
        %v586 = vpop.permute.xlu0 %585
        %vm587 = vcmask 1039360
        %v588 = vsel %vm587, %v582, %v584
        %v589 = vsel %vm587, %v584, %v586
        %v594 = vrot.slane %v537, 4
        %v595 = vrot.slane %v538, 4
        %598 = vrot.lane.b32.xlu0 %v499, 111
        %v599 = vpop.permute.xlu0 %598
        %600 = vrot.lane.b32.xlu0 %v495, 111
        %v601 = vpop.permute.xlu0 %600
        %602 = vrot.lane.b32.xlu0 %v500, 111
        %v603 = vpop.permute.xlu0 %602
        %vm604 = vcmask 908288
        %v605 = vsel %vm604, %v599, %v601
        %v606 = vsel %vm604, %v601, %v603
        %v611 = vrot.slane %v550, 4
        %v612 = vrot.slane %v551, 4
        %615 = vrot.lane.b32.xlu0 %v578, 95
        %v616 = vpop.permute.xlu0 %615
        %617 = vrot.lane.b32.xlu0 %v579, 95
        %v618 = vpop.permute.xlu0 %617
        %619 = vrot.lane.b32.xlu0 %v580, 95
        %v620 = vpop.permute.xlu0 %619
        %vm621 = vcmask 777216
        %v622 = vsel %vm621, %v616, %v618
        %v623 = vsel %vm621, %v618, %v620
        %vm626 = vcmask 1043456
        %v627 = vsel %vm626, %v505, %v588
        %v628 = vsel %vm626, %v506, %v589
        %v629 = vsel %vm626, %v524, %v594
        %v630 = vsel %vm626, %v525, %v595
        %v631 = vsel %vm626, %v605, %v611
        %v632 = vsel %vm626, %v606, %v612
        %v633 = vsel %vm626, %v563, %v622
        %v634 = vsel %vm626, %v564, %v623
        %v635 = vld [vmem:[%s3] sm:$0xf]
        %v636 = vpack.c.bf16 %v629, %v627
        %v637 = vpack.c.bf16 %v630, %v628
        %v638 = vpack.c.bf16 %v633, %v631
        %v639 = vpack.c.bf16 %v634, %v632
        %v640 = vpack.c.bf16 %v576, %v576
        %v641 = vpack.c.bf16 %v577, %v577
        %v642 = vld [vmem:[%s4] sm:$0xff]
        %644 = vset.pattern.permute.xlu0 0
        %645 = vperm.xlu0 %644, %v642
        %v646 = vpop.permute.xlu0 %645
        %vm648 = vcmask 293888
        %v650 = vsel %vm648, %v635, 0
        %v653 = vsel %vm449, %v640, 0
        %v656 = vsel %vm449, %v641, 0
        %658 = vmatpush.bf16.msra.mxu0 0
        %659 = vmatpush.bf16.msra.mxu0 0
        %660 = vmatpush.bf16.msra.mxu0 0
        %661 = vmatpush.bf16.msra.mxu0 0
        %662 = vmatpush.bf16.msra.mxu0 0
        %663 = vmatpush.bf16.msra.mxu0 %v653
        %664 = vmatpush.bf16.msra.mxu0 %v638
        %665 = vmatpush.bf16.msra.mxu0 %v636
        %666 = vmatmul.bf16.gmra.mxu0 %v650
        %v667 = vpop.f32.mrf.mxu0
        %v668 = vadd.f32 %v646, %v667
        %v669 = vpop.f32.mrf.mxu0
        %670 = vdwg.mxu0
        %671 = vmatpush.bf16.msra.mxu0 0
        %672 = vmatpush.bf16.msra.mxu0 0
        %673 = vmatpush.bf16.msra.mxu0 0
        %674 = vmatpush.bf16.msra.mxu0 0
        %675 = vmatpush.bf16.msra.mxu0 0
        %676 = vmatpush.bf16.msra.mxu0 %v656
        %677 = vmatpush.bf16.msra.mxu0 %v639
        %678 = vmatpush.bf16.msra.mxu0 %v637
        %679 = vmatmul.bf16.gmra.mxu0 %v650
        %v680 = vpop.f32.mrf.mxu0
        %v681 = vadd.f32 %v646, %v680
        %v682 = vpop.f32.mrf.mxu0
        %683 = vdwg.mxu0
        %v684 = vmax.f32 %v668, 0.0
        %v685 = vmax.f32 %v681, 0.0
        %v686 = vrot.slane %v486, 4
        %v687 = vrot.slane %v487, 4
        %688 = vrot.lane.b32.xlu0 %v686, 17
        %v689 = vpop.permute.xlu0 %688
        %690 = vrot.lane.b32.xlu0 %v687, 17
        %v691 = vpop.permute.xlu0 %690
        %v692 = vsel %vm494, %v689, %v691
        %v696 = vsel %vm494, 0.0, %v689
        %v697 = vsel %vm494, %v691, 0.0
        %v698 = vsel %vm503, %v696, 0.0
        %v699 = vsel %vm504, %v692, 0.0
        %702 = vrot.lane.b32.xlu0 %v696, 126
        %v703 = vpop.permute.xlu0 %702
        %704 = vrot.lane.b32.xlu0 %v692, 126
        %v705 = vpop.permute.xlu0 %704
        %706 = vrot.lane.b32.xlu0 %v697, 126
        %v707 = vpop.permute.xlu0 %706
        %v708 = vsel %vm519, %v703, %v705
        %v709 = vsel %vm519, %v705, %v707
        %v712 = vsel %vm509, %v708, 0.0
        %v713 = vsel %vm510, %v709, 0.0
        %714 = vrot.lane.b32.xlu0 %v696, 112
        %v715 = vpop.permute.xlu0 %714
        %716 = vrot.lane.b32.xlu0 %v692, 112
        %v717 = vpop.permute.xlu0 %716
        %718 = vrot.lane.b32.xlu0 %v697, 112
        %v719 = vpop.permute.xlu0 %718
        %v720 = vsel %vm532, %v715, %v717
        %v721 = vsel %vm532, %v717, %v719
        %v724 = vsel %vm503, %v720, 0.0
        %v725 = vsel %vm504, %v721, 0.0
        %726 = vrot.lane.b32.xlu0 %v696, 110
        %v727 = vpop.permute.xlu0 %726
        %728 = vrot.lane.b32.xlu0 %v692, 110
        %v729 = vpop.permute.xlu0 %728
        %730 = vrot.lane.b32.xlu0 %v697, 110
        %v731 = vpop.permute.xlu0 %730
        %v732 = vsel %vm545, %v727, %v729
        %v733 = vsel %vm545, %v729, %v731
        %v736 = vsel %vm509, %v732, 0.0
        %v737 = vsel %vm510, %v733, 0.0
        %738 = vrot.lane.b32.xlu0 %v696, 96
        %v739 = vpop.permute.xlu0 %738
        %740 = vrot.lane.b32.xlu0 %v692, 96
        %v741 = vpop.permute.xlu0 %740
        %742 = vrot.lane.b32.xlu0 %v697, 96
        %v743 = vpop.permute.xlu0 %742
        %v744 = vsel %vm558, %v739, %v741
        %v745 = vsel %vm558, %v741, %v743
        %v748 = vsel %vm503, %v744, 0.0
        %v749 = vsel %vm504, %v745, 0.0
        %750 = vrot.lane.b32.xlu0 %v696, 94
        %v751 = vpop.permute.xlu0 %750
        %752 = vrot.lane.b32.xlu0 %v692, 94
        %v753 = vpop.permute.xlu0 %752
        %754 = vrot.lane.b32.xlu0 %v697, 94
        %v755 = vpop.permute.xlu0 %754
        %v756 = vsel %vm571, %v751, %v753
        %v757 = vsel %vm571, %v753, %v755
        %v760 = vsel %vm509, %v756, 0.0
        %v761 = vsel %vm510, %v757, 0.0
        %v762 = vrot.slane %v696, 4
        %v763 = vrot.slane %v692, 4
        %v764 = vrot.slane %v697, 4
        %765 = vrot.lane.b32.xlu0 %v762, 127
        %v766 = vpop.permute.xlu0 %765
        %767 = vrot.lane.b32.xlu0 %v763, 127
        %v768 = vpop.permute.xlu0 %767
        %769 = vrot.lane.b32.xlu0 %v764, 127
        %v770 = vpop.permute.xlu0 %769
        %v771 = vsel %vm587, %v766, %v768
        %v772 = vsel %vm587, %v768, %v770
        %v777 = vrot.slane %v724, 4
        %v778 = vrot.slane %v725, 4
        %781 = vrot.lane.b32.xlu0 %v696, 111
        %v782 = vpop.permute.xlu0 %781
        %783 = vrot.lane.b32.xlu0 %v692, 111
        %v784 = vpop.permute.xlu0 %783
        %785 = vrot.lane.b32.xlu0 %v697, 111
        %v786 = vpop.permute.xlu0 %785
        %v787 = vsel %vm604, %v782, %v784
        %v788 = vsel %vm604, %v784, %v786
        %v793 = vrot.slane %v736, 4
        %v794 = vrot.slane %v737, 4
        %797 = vrot.lane.b32.xlu0 %v762, 95
        %v798 = vpop.permute.xlu0 %797
        %799 = vrot.lane.b32.xlu0 %v763, 95
        %v800 = vpop.permute.xlu0 %799
        %801 = vrot.lane.b32.xlu0 %v764, 95
        %v802 = vpop.permute.xlu0 %801
        %v803 = vsel %vm621, %v798, %v800
        %v804 = vsel %vm621, %v800, %v802
        %v807 = vsel %vm626, %v698, %v771
        %v808 = vsel %vm626, %v699, %v772
        %v809 = vsel %vm626, %v712, %v777
        %v810 = vsel %vm626, %v713, %v778
        %v811 = vsel %vm626, %v787, %v793
        %v812 = vsel %vm626, %v788, %v794
        %v813 = vsel %vm626, %v748, %v803
        %v814 = vsel %vm626, %v749, %v804
        %v815 = vld [vmem:[%s5] sm:$0xf]
        %v816 = vpack.c.bf16 %v809, %v807
        %v817 = vpack.c.bf16 %v810, %v808
        %v818 = vpack.c.bf16 %v813, %v811
        %v819 = vpack.c.bf16 %v814, %v812
        %v820 = vpack.c.bf16 %v760, %v760
        %v821 = vpack.c.bf16 %v761, %v761
        %v822 = vld [vmem:[%s6] sm:$0xff]
        %824 = vset.pattern.permute.xlu0 0
        %825 = vperm.xlu0 %824, %v822
        %v826 = vpop.permute.xlu0 %825
        %v829 = vsel %vm648, %v815, 0
        %v832 = vsel %vm449, %v820, 0
        %v835 = vsel %vm449, %v821, 0
        %837 = vmatpush.bf16.msra.mxu0 0
        %838 = vmatpush.bf16.msra.mxu0 0
        %839 = vmatpush.bf16.msra.mxu0 0
        %840 = vmatpush.bf16.msra.mxu0 0
        %841 = vmatpush.bf16.msra.mxu0 0
        %842 = vmatpush.bf16.msra.mxu0 %v832
        %843 = vmatpush.bf16.msra.mxu0 %v818
        %844 = vmatpush.bf16.msra.mxu0 %v816
        %845 = vmatmul.bf16.gmra.mxu0 %v829
        %v846 = vpop.f32.mrf.mxu0
        %v847 = vadd.f32 %v826, %v846
        %v848 = vpop.f32.mrf.mxu0
        %849 = vdwg.mxu0
        %850 = vmatpush.bf16.msra.mxu0 0
        %851 = vmatpush.bf16.msra.mxu0 0
        %852 = vmatpush.bf16.msra.mxu0 0
        %853 = vmatpush.bf16.msra.mxu0 0
        %854 = vmatpush.bf16.msra.mxu0 0
        %855 = vmatpush.bf16.msra.mxu0 %v835
        %856 = vmatpush.bf16.msra.mxu0 %v819
        %857 = vmatpush.bf16.msra.mxu0 %v817
        %858 = vmatmul.bf16.gmra.mxu0 %v829
        %v859 = vpop.f32.mrf.mxu0
        %v860 = vadd.f32 %v826, %v859
        %v861 = vpop.f32.mrf.mxu0
        %862 = vdwg.mxu0
        %v863 = vmax.f32 %v847, 0.0
        %v864 = vmax.f32 %v860, 0.0
        %867 = vrot.lane.b32.xlu0 %v863, 17
        %v868 = vpop.permute.xlu0 %867
        %869 = vrot.lane.b32.xlu0 %v864, 17
        %v870 = vpop.permute.xlu0 %869
        %v871 = vsel %vm494, %v868, %v870
        %v875 = vsel %vm494, 0.0, %v868
        %v876 = vsel %vm494, %v870, 0.0
        %v877 = vsel %vm503, %v875, 0.0
        %v878 = vsel %vm504, %v871, 0.0
        %881 = vrot.lane.b32.xlu0 %v875, 126
        %v882 = vpop.permute.xlu0 %881
        %883 = vrot.lane.b32.xlu0 %v871, 126
        %v884 = vpop.permute.xlu0 %883
        %885 = vrot.lane.b32.xlu0 %v876, 126
        %v886 = vpop.permute.xlu0 %885
        %v887 = vsel %vm519, %v882, %v884
        %v888 = vsel %vm519, %v884, %v886
        %v891 = vsel %vm509, %v887, 0.0
        %v892 = vsel %vm510, %v888, 0.0
        %893 = vrot.lane.b32.xlu0 %v875, 112
        %v894 = vpop.permute.xlu0 %893
        %895 = vrot.lane.b32.xlu0 %v871, 112
        %v896 = vpop.permute.xlu0 %895
        %897 = vrot.lane.b32.xlu0 %v876, 112
        %v898 = vpop.permute.xlu0 %897
        %v899 = vsel %vm532, %v894, %v896
        %v900 = vsel %vm532, %v896, %v898
        %v903 = vsel %vm503, %v899, 0.0
        %v904 = vsel %vm504, %v900, 0.0
        %905 = vrot.lane.b32.xlu0 %v875, 110
        %v906 = vpop.permute.xlu0 %905
        %907 = vrot.lane.b32.xlu0 %v871, 110
        %v908 = vpop.permute.xlu0 %907
        %909 = vrot.lane.b32.xlu0 %v876, 110
        %v910 = vpop.permute.xlu0 %909
        %v911 = vsel %vm545, %v906, %v908
        %v912 = vsel %vm545, %v908, %v910
        %v915 = vsel %vm509, %v911, 0.0
        %v916 = vsel %vm510, %v912, 0.0
        %917 = vrot.lane.b32.xlu0 %v875, 96
        %v918 = vpop.permute.xlu0 %917
        %919 = vrot.lane.b32.xlu0 %v871, 96
        %v920 = vpop.permute.xlu0 %919
        %921 = vrot.lane.b32.xlu0 %v876, 96
        %v922 = vpop.permute.xlu0 %921
        %v923 = vsel %vm558, %v918, %v920
        %v924 = vsel %vm558, %v920, %v922
        %v927 = vsel %vm503, %v923, 0.0
        %v928 = vsel %vm504, %v924, 0.0
        %929 = vrot.lane.b32.xlu0 %v875, 94
        %v930 = vpop.permute.xlu0 %929
        %931 = vrot.lane.b32.xlu0 %v871, 94
        %v932 = vpop.permute.xlu0 %931
        %933 = vrot.lane.b32.xlu0 %v876, 94
        %v934 = vpop.permute.xlu0 %933
        %v935 = vsel %vm571, %v930, %v932
        %v936 = vsel %vm571, %v932, %v934
        %v939 = vsel %vm509, %v935, 0.0
        %v940 = vsel %vm510, %v936, 0.0
        %941 = vrot.lane.b32.xlu0 %v875, 127
        %v942 = vpop.permute.xlu0 %941
        %943 = vrot.lane.b32.xlu0 %v871, 127
        %v944 = vpop.permute.xlu0 %943
        %945 = vrot.lane.b32.xlu0 %v876, 127
        %v946 = vpop.permute.xlu0 %945
        %v947 = vsel %vm587, %v942, %v944
        %v948 = vsel %vm587, %v944, %v946
        %951 = vrot.lane.b32.xlu0 %v875, 111
        %v952 = vpop.permute.xlu0 %951
        %953 = vrot.lane.b32.xlu0 %v871, 111
        %v954 = vpop.permute.xlu0 %953
        %955 = vrot.lane.b32.xlu0 %v876, 111
        %v956 = vpop.permute.xlu0 %955
        %v957 = vsel %vm604, %v952, %v954
        %v958 = vsel %vm604, %v954, %v956
        %961 = vrot.lane.b32.xlu0 %v875, 95
        %v962 = vpop.permute.xlu0 %961
        %963 = vrot.lane.b32.xlu0 %v871, 95
        %v964 = vpop.permute.xlu0 %963
        %965 = vrot.lane.b32.xlu0 %v876, 95
        %v966 = vpop.permute.xlu0 %965
        %v967 = vsel %vm621, %v962, %v964
        %v968 = vsel %vm621, %v964, %v966
        %v971 = vld [vmem:[%s7] sm:$0xf]
        %v972 = vpack.c.bf16 %v947, %v877
        %v973 = vpack.c.bf16 %v948, %v878
        %v974 = vpack.c.bf16 %v903, %v891
        %v975 = vpack.c.bf16 %v904, %v892
        %v976 = vpack.c.bf16 %v915, %v957
        %v977 = vpack.c.bf16 %v916, %v958
        %v978 = vpack.c.bf16 %v967, %v927
        %v979 = vpack.c.bf16 %v968, %v928
        %v980 = vpack.c.bf16 %v939, %v939
        %v981 = vpack.c.bf16 %v940, %v940
        %v982 = vld [vmem:[%s8] sm:$0xff]
        %984 = vset.pattern.permute.xlu0 0
        %985 = vperm.xlu0 %984, %v982
        %v986 = vpop.permute.xlu0 %985
        %vm988 = vcmask 588800
        %v990 = vsel %vm988, %v971, 0
        %v993 = vsel %vm626, %v980, 0
        %v996 = vsel %vm626, %v981, 0
        %998 = vmatpush.bf16.msra.mxu0 0
        %999 = vmatpush.bf16.msra.mxu0 0
        %1000 = vmatpush.bf16.msra.mxu0 0
        %1001 = vmatpush.bf16.msra.mxu0 %v993
        %1002 = vmatpush.bf16.msra.mxu0 %v978
        %1003 = vmatpush.bf16.msra.mxu0 %v976
        %1004 = vmatpush.bf16.msra.mxu0 %v974
        %1005 = vmatpush.bf16.msra.mxu0 %v972
        %1006 = vmatmul.bf16.gmra.mxu0 %v990
        %v1007 = vpop.f32.mrf.mxu0
        %v1008 = vadd.f32 %v986, %v1007
        %v1009 = vpop.f32.mrf.mxu0
        %1010 = vdwg.mxu0
        %1011 = vmatpush.bf16.msra.mxu0 0
        %1012 = vmatpush.bf16.msra.mxu0 0
        %1013 = vmatpush.bf16.msra.mxu0 0
        %1014 = vmatpush.bf16.msra.mxu0 %v996
        %1015 = vmatpush.bf16.msra.mxu0 %v979
        %1016 = vmatpush.bf16.msra.mxu0 %v977
        %1017 = vmatpush.bf16.msra.mxu0 %v975
        %1018 = vmatpush.bf16.msra.mxu0 %v973
        %1019 = vmatmul.bf16.gmra.mxu0 %v990
        %v1020 = vpop.f32.mrf.mxu0
        %v1021 = vadd.f32 %v986, %v1020
        %v1022 = vpop.f32.mrf.mxu0
        %1023 = vdwg.mxu0
        %v1024 = vmax.f32 %v1008, 0.0
        %v1025 = vmax.f32 %v1021, 0.0
        %1026 = vst [vmem:[#allocation1] ss:$2 sm:$0xff] %v386
        %v1027 = vld.sshfl [vmem:[#allocation1] sm:$0xff pattern:$0x75316420]
        %v1028 = vld.sshfl [vmem:[#allocation1 + $0x8] sm:$0xff pattern:$0x75316420]
        %1029 = vrot.lane.b32.xlu0 %v1027, 17
        %v1030 = vpop.permute.xlu0 %1029
        %1031 = vrot.lane.b32.xlu0 %v1028, 17
        %v1032 = vpop.permute.xlu0 %1031
        %v1033 = vsel %vm494, %v1030, %v1032
        %v1037 = vsel %vm494, -inf, %v1030
        %v1038 = vsel %vm494, %v1032, -inf
        %v1039 = vsel %vm503, %v1037, -inf
        %v1040 = vsel %vm504, %v1033, -inf
        %1043 = vrot.lane.b32.xlu0 %v1037, 126
        %v1044 = vpop.permute.xlu0 %1043
        %1045 = vrot.lane.b32.xlu0 %v1033, 126
        %v1046 = vpop.permute.xlu0 %1045
        %1047 = vrot.lane.b32.xlu0 %v1038, 126
        %v1048 = vpop.permute.xlu0 %1047
        %v1049 = vsel %vm519, %v1044, %v1046
        %v1050 = vsel %vm519, %v1046, %v1048
        %v1053 = vsel %vm509, %v1049, -inf
        %v1054 = vsel %vm510, %v1050, -inf
        %1055 = vrot.lane.b32.xlu0 %v1037, 112
        %v1056 = vpop.permute.xlu0 %1055
        %1057 = vrot.lane.b32.xlu0 %v1033, 112
        %v1058 = vpop.permute.xlu0 %1057
        %1059 = vrot.lane.b32.xlu0 %v1038, 112
        %v1060 = vpop.permute.xlu0 %1059
        %v1061 = vsel %vm532, %v1056, %v1058
        %v1062 = vsel %vm532, %v1058, %v1060
        %v1065 = vsel %vm503, %v1061, -inf
        %v1066 = vsel %vm504, %v1062, -inf
        %1067 = vrot.lane.b32.xlu0 %v1037, 110
        %v1068 = vpop.permute.xlu0 %1067
        %1069 = vrot.lane.b32.xlu0 %v1033, 110
        %v1070 = vpop.permute.xlu0 %1069
        %1071 = vrot.lane.b32.xlu0 %v1038, 110
        %v1072 = vpop.permute.xlu0 %1071
        %v1073 = vsel %vm545, %v1068, %v1070
        %v1074 = vsel %vm545, %v1070, %v1072
        %v1077 = vsel %vm509, %v1073, -inf
        %v1078 = vsel %vm510, %v1074, -inf
        %1079 = vrot.lane.b32.xlu0 %v1037, 96
        %v1080 = vpop.permute.xlu0 %1079
        %1081 = vrot.lane.b32.xlu0 %v1033, 96
        %v1082 = vpop.permute.xlu0 %1081
        %1083 = vrot.lane.b32.xlu0 %v1038, 96
        %v1084 = vpop.permute.xlu0 %1083
        %v1085 = vsel %vm558, %v1080, %v1082
        %v1086 = vsel %vm558, %v1082, %v1084
        %v1089 = vsel %vm503, %v1085, -inf
        %v1090 = vsel %vm504, %v1086, -inf
        %1091 = vrot.lane.b32.xlu0 %v1037, 94
        %v1092 = vpop.permute.xlu0 %1091
        %1093 = vrot.lane.b32.xlu0 %v1033, 94
        %v1094 = vpop.permute.xlu0 %1093
        %1095 = vrot.lane.b32.xlu0 %v1038, 94
        %v1096 = vpop.permute.xlu0 %1095
        %v1097 = vsel %vm571, %v1092, %v1094
        %v1098 = vsel %vm571, %v1094, %v1096
        %v1101 = vsel %vm509, %v1097, -inf
        %v1102 = vsel %vm510, %v1098, -inf
        %1103 = vrot.lane.b32.xlu0 %v1037, 127
        %v1104 = vpop.permute.xlu0 %1103
        %1105 = vrot.lane.b32.xlu0 %v1033, 127
        %v1106 = vpop.permute.xlu0 %1105
        %1107 = vrot.lane.b32.xlu0 %v1038, 127
        %v1108 = vpop.permute.xlu0 %1107
        %v1109 = vsel %vm587, %v1104, %v1106
        %v1110 = vsel %vm587, %v1106, %v1108
        %v1113 = vmax.f32 %v1039, %v1109
        %v1114 = vmax.f32 %v1040, %v1110
        %v1115 = vmax.f32 %v1113, %v1053
        %v1116 = vmax.f32 %v1114, %v1054
        %v1117 = vmax.f32 %v1115, %v1065
        %v1118 = vmax.f32 %v1116, %v1066
        %1119 = vrot.lane.b32.xlu0 %v1037, 111
        %v1120 = vpop.permute.xlu0 %1119
        %1121 = vrot.lane.b32.xlu0 %v1033, 111
        %v1122 = vpop.permute.xlu0 %1121
        %1123 = vrot.lane.b32.xlu0 %v1038, 111
        %v1124 = vpop.permute.xlu0 %1123
        %v1125 = vsel %vm604, %v1120, %v1122
        %v1126 = vsel %vm604, %v1122, %v1124
        %v1129 = vmax.f32 %v1117, %v1125
        %v1130 = vmax.f32 %v1118, %v1126
        %v1131 = vmax.f32 %v1129, %v1077
        %v1132 = vmax.f32 %v1130, %v1078
        %v1133 = vmax.f32 %v1131, %v1089
        %v1134 = vmax.f32 %v1132, %v1090
        %1135 = vrot.lane.b32.xlu0 %v1037, 95
        %v1136 = vpop.permute.xlu0 %1135
        %1137 = vrot.lane.b32.xlu0 %v1033, 95
        %v1138 = vpop.permute.xlu0 %1137
        %1139 = vrot.lane.b32.xlu0 %v1038, 95
        %v1140 = vpop.permute.xlu0 %1139
        %v1141 = vsel %vm621, %v1136, %v1138
        %v1142 = vsel %vm621, %v1138, %v1140
        %v1145 = vmax.f32 %v1133, %v1141
        %v1146 = vmax.f32 %v1134, %v1142
        %v1147 = vmax.f32 %v1145, %v1101
        %v1148 = vmax.f32 %v1146, %v1102
        %v1149 = vld [vmem:[%s9] sm:$0xf]
        %v1150 = vpack.c.bf16 %v1147, %v1147
        %v1151 = vpack.c.bf16 %v1148, %v1148
        %v1152 = vld [vmem:[%s10] sm:$0xff]
        %1154 = vset.pattern.permute.xlu0 0
        %1155 = vperm.xlu0 %1154, %v1152
        %v1156 = vpop.permute.xlu0 %1155
        %v1159 = vsel %vm445, %v1149, 0
        %v1162 = vsel %vm449, %v1150, 0
        %v1165 = vsel %vm449, %v1151, 0
        %1167 = vmatpush.bf16.msra.mxu0 0
        %1168 = vmatpush.bf16.msra.mxu0 0
        %1169 = vmatpush.bf16.msra.mxu0 0
        %1170 = vmatpush.bf16.msra.mxu0 0
        %1171 = vmatpush.bf16.msra.mxu0 0
        %1172 = vmatpush.bf16.msra.mxu0 0
        %1173 = vmatpush.bf16.msra.mxu0 0
        %1174 = vmatpush.bf16.msra.mxu0 %v1162
        %1175 = vmatmul.bf16.gmra.mxu0 %v1159
        %v1176 = vpop.f32.mrf.mxu0
        %v1177 = vadd.f32 %v1156, %v1176
        %v1178 = vpop.f32.mrf.mxu0
        %1179 = vdwg.mxu0
        %1180 = vmatpush.bf16.msra.mxu0 0
        %1181 = vmatpush.bf16.msra.mxu0 0
        %1182 = vmatpush.bf16.msra.mxu0 0
        %1183 = vmatpush.bf16.msra.mxu0 0
        %1184 = vmatpush.bf16.msra.mxu0 0
        %1185 = vmatpush.bf16.msra.mxu0 0
        %1186 = vmatpush.bf16.msra.mxu0 0
        %1187 = vmatpush.bf16.msra.mxu0 %v1165
        %1188 = vmatmul.bf16.gmra.mxu0 %v1159
        %v1189 = vpop.f32.mrf.mxu0
        %v1190 = vadd.f32 %v1156, %v1189
        %v1191 = vpop.f32.mrf.mxu0
        %1192 = vdwg.mxu0
        %v1193 = vmax.f32 %v1177, 0.0
        %v1194 = vmax.f32 %v1190, 0.0
        %1195 = vst [vmem:[%s379] sm:$0xff] %v484
        %1196 = vst [vmem:[%s379 + $0x8] sm:$0xff] %v485
        %1197 = vst [vmem:[%s379 + $0x10] sm:$0xff] %v684
        %1198 = vst [vmem:[%s379 + $0x18] sm:$0xff] %v685
        %1199 = vst [vmem:[%s379 + $0x20] sm:$0xff] %v1024
        %1200 = vst [vmem:[%s379 + $0x28] sm:$0xff] %v1025
        %1201 = vst [vmem:[%s379 + $0x30] sm:$0xff] %v1193
        %1202 = vst [vmem:[%s379 + $0x38] sm:$0xff] %v1194
        %s1203 = sand.u32 %s269, 1
        %s1204 = scalar_lea.sflag [#allocation3], %s1203
        %s1205 = sand.u32 %s269, 1
        %s1206 = smul.addr %s1205, 64
        %s1207 = scalar_lea.vmem [#allocation2], %s1206
        // Predicated region
        $region65: #{tpu_custom_call.1} parent=63 // pred_check
          %p1208 = pneg %p279
        $region66: #{tpu_custom_call.1} parent=63 // pred_check_branch
          %1210 = sbr.rel (%p1208) target = $region68
        $region67: #{tpu_custom_call.1} parent=63 // pred_region
          %1212 = vsyncadd %s1204, 0
          %s1213 = smul.addr %s25, 8
          %s1214 = smul.addr %s1213, 8
          %s1215 = scalar_lea.hbm %s11, %s1214
          %s1216 = sshll.u32 %s1207, 4
          %s1217 = int_to_ptr.vmem [resolvable:$true] %s1216
          %s1218 = sshll.u32 %s1215, 4
          %s1219 = int_to_ptr.hbm [resolvable:$true] %s1218
          %1224 = dma.vmem_to_hbm [thread:$0]  %s1217, 1024, %s1219, %s1204, 256, 256, 16
        $region68: #{tpu_custom_call.1} parent=63 // pred_fallthru
          _
      $region64: #{tpu_custom_call.1} parent=5 // pred_fallthru
        _
      %p1225 = scmp.le.s32.totalorder 2, %s20
      // Predicated region
      $region69: #{tpu_custom_call.1} parent=5 // pred_check
        %p1226 = pneg %p1225
      $region70: #{tpu_custom_call.1} parent=5 // pred_check_branch
        %1228 = sbr.rel (%p1226) target = $region72
      $region71: #{tpu_custom_call.1} parent=5 // pred_region
        %s1229 = ssub.s32 %s20, 2
        // Predicated region
        $region73: #{tpu_custom_call.1} parent=71 // pred_check
          %p1230 = pneg %p285
        $region74: #{tpu_custom_call.1} parent=71 // pred_check_branch
          %1232 = sbr.rel (%p1230) target = $region76
        $region75: #{tpu_custom_call.1} parent=71 // pred_region
          %s1233 = sand.u32 %s270, 1
          %s1234 = scalar_lea.sflag [#allocation3], %s1233
          %s1235 = sand.u32 %s270, 1
          %s1236 = smul.addr %s1235, 64
          %s1237 = scalar_lea.vmem [#allocation2], %s1236
          %1239 = dma.done %s1234, 1024
        $region76: #{tpu_custom_call.1} parent=71 // pred_fallthru
          _
      $region72: #{tpu_custom_call.1} parent=5 // pred_fallthru
        _
    $region6: #{tpu_custom_call.1} parent=1 // loop_footer
      %s24 = sadd.s32 1, %s20
    $region7: #{tpu_custom_call.1} parent=1 // loop_footer_branch
      %19 = sbr.rel target = $region3
    $region8: #{tpu_custom_call.1} parent=1 // loop_exit
      _
    %1240 = vsyncpa [#allocation3], 1
    %s1241 = scalar_lea.sflag [#allocation3], 1
    %1242 = vsyncpa %s1241, 1

</llo_original>
